<compile_context>
chip_gen: v7x
topology: tpu7x:2x2x1
jax: 0.10.0
libtpu: 0.0.40
codegen_flags: <defaults>
</compile_context>

<pallas_src>
import functools

import jax
import jax.numpy as jnp
from jax.experimental import pallas as pl
from jax.experimental.pallas import tpu as pltpu


def normal_head_kernel(x_ref,
                       w1_ref, b1_ref, s1_ref, t1_ref,
                       w2_ref, b2_ref, s2_ref, t2_ref,
                       w3_ref, b3_ref,
                       o1_ref, o2_ref, o3_ref):
    # x: (C, tile_T) -- channels on sublanes, time on lanes.
    x = x_ref[...]

    # stage 1: conv1 (pointwise, W @ X) -> output #1   (C1, tile_T)
    y1 = jnp.dot(w1_ref[...], x, preferred_element_type=jnp.float32) + b1_ref[...]
    o1_ref[...] = y1.astype(o1_ref.dtype)

    # bn1 (eval-mode affine) + relu + conv2 -> output #2   (C2, tile_T)
    h1 = jnp.maximum(y1 * s1_ref[...] + t1_ref[...], 0.0)
    y2 = jnp.dot(w2_ref[...], h1, preferred_element_type=jnp.float32) + b2_ref[...]
    o2_ref[...] = y2.astype(o2_ref.dtype)

    # bn2 + relu + conv3 + sigmoid -> output #3   (1, tile_T)
    h2 = jnp.maximum(y2 * s2_ref[...] + t2_ref[...], 0.0)
    y3 = jnp.dot(w3_ref[...], h2, preferred_element_type=jnp.float32) + b3_ref[...]
    o3_ref[...] = jax.nn.sigmoid(y3).astype(o3_ref.dtype)


@functools.partial(jax.jit, static_argnames=("tile_t",))
def normal_head_forward(x_nct, params, *, tile_t=512):
    """x_nct: (B, C, T) float32 (PyTorch NCT convention). Returns NCT outputs."""
    B, C, T = x_nct.shape
    (w1, b1, s1, t1, w2, b2, s2, t2, w3, b3) = params
    C1, C2 = w1.shape[0], w2.shape[0]
    assert tile_t % 128 == 0, "tile_t must be a multiple of the 128-lane width"

    # Effective tile: big (default 512) but never bigger than T rounded up to 128.
    tile = min(tile_t, pl.cdiv(T, 128) * 128)
    T_pad = pl.cdiv(T, tile) * tile
    if T_pad != T:
        x_nct = jnp.pad(x_nct, ((0, 0), (0, 0), (0, T_pad - T)))

    grid = (B, T_pad // tile)

    def slab(cout):
        # (batch squeezed, full channel dim, lane-dense T tile)
        return pl.BlockSpec((pl.Squeezed(), cout, tile), lambda b, t: (b, 0, t))

    def const(r, c):
        # small constant operands (weights / bias / folded-BN), same block every step
        return pl.BlockSpec((r, c), lambda b, t: (0, 0))

    M = B * T_pad
    cost = pl.CostEstimate(
        flops=2 * M * (C * C1 + C1 * C2 + C2),
        transcendentals=M,  # one sigmoid per output element of o3
        bytes_accessed=4 * (M * (C + C1 + C2 + 1)
                            + C * C1 + C1 * C2 + C2
                            + 3 * (C1 + C2) + 1),
    )

    o1, o2, o3 = pl.pallas_call(
        normal_head_kernel,
        out_shape=(
            jax.ShapeDtypeStruct((B, C1, T_pad), jnp.float32),
            jax.ShapeDtypeStruct((B, C2, T_pad), jnp.float32),
            jax.ShapeDtypeStruct((B, 1, T_pad), jnp.float32),
        ),
        grid=grid,
        in_specs=[
            slab(C),          # x tile
            const(C1, C),     # w1
            const(C1, 1),     # b1
            const(C1, 1),     # bn1 scale
            const(C1, 1),     # bn1 shift
            const(C2, C1),    # w2
            const(C2, 1),     # b2
            const(C2, 1),     # bn2 scale
            const(C2, 1),     # bn2 shift
            const(1, C2),     # w3
            const(1, 1),      # b3
        ],
        out_specs=(slab(C1), slab(C2), slab(1)),
        compiler_params=pltpu.CompilerParams(
            dimension_semantics=("parallel", "parallel"),
            # headroom for larger tile_t sweeps; well under v7x's 64 MiB physical VMEM
            vmem_limit_bytes=32 * 1024 * 1024,
        ),
        cost_estimate=cost,
    )(x_nct, w1, b1, s1, t1, w2, b2, s2, t2, w3, b3)

    if T_pad != T:
        o1, o2, o3 = o1[:, :, :T], o2[:, :, :T], o3[:, :, :T]
    return o1, o2, o3


def init_params(key, in_channel=512, ratios=(16, 32)):
    """Deterministic parameter init matching the module's shapes (kernel_size=1 convs).

    Conv weights stored as (Cout, Cin) == PyTorch weight[:, :, 0];
    biases and folded eval-mode BatchNorm scale/shift stored as (Cout, 1).
    """
    C = in_channel
    C1 = C // ratios[0]
    C2 = C // ratios[1]
    ks = jax.random.split(key, 12)
    eps = 1e-5

    w1 = jax.random.normal(ks[0], (C1, C), jnp.float32) * 0.05
    b1 = jax.random.normal(ks[1], (C1, 1), jnp.float32) * 0.05
    w2 = jax.random.normal(ks[2], (C2, C1), jnp.float32) * 0.05
    b2 = jax.random.normal(ks[3], (C2, 1), jnp.float32) * 0.05
    w3 = jax.random.normal(ks[4], (1, C2), jnp.float32) * 0.05
    b3 = jax.random.normal(ks[5], (1, 1), jnp.float32) * 0.05

    # BatchNorm (eval mode): fold gamma/beta/running stats into scale/shift
    g1 = 1.0 + 0.1 * jax.random.normal(ks[6], (C1, 1), jnp.float32)
    be1 = 0.1 * jax.random.normal(ks[7], (C1, 1), jnp.float32)
    rm1 = 0.1 * jax.random.normal(ks[8], (C1, 1), jnp.float32)
    rv1 = jnp.abs(1.0 + 0.1 * jax.random.normal(ks[9], (C1, 1), jnp.float32))
    s1 = g1 / jnp.sqrt(rv1 + eps)
    t1 = be1 - rm1 * s1

    g2 = 1.0 + 0.1 * jax.random.normal(ks[10], (C2, 1), jnp.float32)
    be2 = 0.1 * jax.random.normal(ks[11], (C2, 1), jnp.float32)
    s2 = g2 / jnp.sqrt(1.0 + eps)   # running_mean=0, running_var=1
    t2 = be2

    return (w1, b1, s1, t1, w2, b2, s2, t2, w3, b3)


def reference_forward(x_nct, params):
    """Pure-JAX reference of the PyTorch forward (eval-mode BN), NCT layout."""
    (w1, b1, s1, t1, w2, b2, s2, t2, w3, b3) = params
    y1 = jnp.einsum('oc,bct->bot', w1, x_nct) + b1[None]
    h1 = jnp.maximum(y1 * s1[None] + t1[None], 0.0)
    y2 = jnp.einsum('oc,bct->bot', w2, h1) + b2[None]
    h2 = jnp.maximum(y2 * s2[None] + t2[None], 0.0)
    y3 = jax.nn.sigmoid(jnp.einsum('oc,bct->bot', w3, h2) + b3[None])
    return y1, y2, y3


if __name__ == "__main__":
    # x: BN x C x T.  T=200 (not a multiple of 128) exercises the pad/slice path.
    B, C, T = 2, 512, 200
    key = jax.random.PRNGKey(0)
    kx, kp = jax.random.split(key)
    x = jax.random.normal(kx, (B, C, T), jnp.float32)
    params = init_params(kp, in_channel=C, ratios=(16, 32))

    out1, out2, out3 = normal_head_forward(x, params, tile_t=512)
    jax.block_until_ready((out1, out2, out3))

    # sanity check against pure-JAX reference
    r1, r2, r3 = reference_forward(x, params)
    assert out1.shape == (B, C // 16, T)
    assert out2.shape == (B, C // 32, T)
    assert out3.shape == (B, 1, T)
    assert jnp.allclose(out1, r1, atol=1e-4, rtol=1e-4)
    assert jnp.allclose(out2, r2, atol=1e-4, rtol=1e-4)
    assert jnp.allclose(out3, r3, atol=1e-4, rtol=1e-4)

    print("KERNEL_OK")
</pallas_src>

<mosaic_0001>
module attributes {stable_mosaic.version = 11 : i64} {
  func.func @normal_head_kernel(%arg0: i32, %arg1: i32, %arg2: memref<1x512x256xf32, #tpu.memory_space<vmem>>, %arg3: memref<32x512xf32, #tpu.memory_space<vmem>>, %arg4: memref<32x1xf32, #tpu.memory_space<vmem>>, %arg5: memref<32x1xf32, #tpu.memory_space<vmem>>, %arg6: memref<32x1xf32, #tpu.memory_space<vmem>>, %arg7: memref<16x32xf32, #tpu.memory_space<vmem>>, %arg8: memref<16x1xf32, #tpu.memory_space<vmem>>, %arg9: memref<16x1xf32, #tpu.memory_space<vmem>>, %arg10: memref<16x1xf32, #tpu.memory_space<vmem>>, %arg11: memref<1x16xf32, #tpu.memory_space<vmem>>, %arg12: memref<1x1xf32, #tpu.memory_space<vmem>>, %arg13: memref<1x32x256xf32, #tpu.memory_space<vmem>>, %arg14: memref<1x16x256xf32, #tpu.memory_space<vmem>>, %arg15: memref<1x1x256xf32, #tpu.memory_space<vmem>>) attributes {dimension_semantics = [#tpu.dimension_semantics<parallel>, #tpu.dimension_semantics<parallel>], iteration_bounds = array<i64: 2, 1>, scalar_prefetch = 0 : i64, scratch_operands = 0 : i64, tpu.core_type = #tpu.core_type<tc>, window_params = [{transform_indices = @transform_0, window_bounds = array<i64: 1, 512, 256>}, {pipeline_mode = #tpu.pipeline_mode<synchronous>, transform_indices = @transform_1, window_bounds = array<i64: 32, 512>}, {pipeline_mode = #tpu.pipeline_mode<synchronous>, transform_indices = @transform_2, window_bounds = array<i64: 32, 1>}, {pipeline_mode = #tpu.pipeline_mode<synchronous>, transform_indices = @transform_3, window_bounds = array<i64: 32, 1>}, {pipeline_mode = #tpu.pipeline_mode<synchronous>, transform_indices = @transform_4, window_bounds = array<i64: 32, 1>}, {pipeline_mode = #tpu.pipeline_mode<synchronous>, transform_indices = @transform_5, window_bounds = array<i64: 16, 32>}, {pipeline_mode = #tpu.pipeline_mode<synchronous>, transform_indices = @transform_6, window_bounds = array<i64: 16, 1>}, {pipeline_mode = #tpu.pipeline_mode<synchronous>, transform_indices = @transform_7, window_bounds = array<i64: 16, 1>}, {pipeline_mode = #tpu.pipeline_mode<synchronous>, transform_indices = @transform_8, window_bounds = array<i64: 16, 1>}, {pipeline_mode = #tpu.pipeline_mode<synchronous>, transform_indices = @transform_9, window_bounds = array<i64: 1, 16>}, {pipeline_mode = #tpu.pipeline_mode<synchronous>, transform_indices = @transform_10, window_bounds = array<i64: 1, 1>}, {transform_indices = @transform_11, window_bounds = array<i64: 1, 32, 256>}, {transform_indices = @transform_12, window_bounds = array<i64: 1, 16, 256>}, {transform_indices = @transform_13, window_bounds = array<i64: 1, 1, 256>}]} {
    %c0 = arith.constant 0 : index
    %c0_0 = arith.constant 0 : index
    %c0_1 = arith.constant 0 : index
    %0 = vector.load %arg2[%c0, %c0_0, %c0_1] : memref<1x512x256xf32, #tpu.memory_space<vmem>>, vector<1x512x256xf32>
    %1 = vector.shape_cast %0 : vector<1x512x256xf32> to vector<512x256xf32>
    %c0_2 = arith.constant 0 : index
    %c0_3 = arith.constant 0 : index
    %2 = vector.load %arg3[%c0_2, %c0_3] : memref<32x512xf32, #tpu.memory_space<vmem>>, vector<32x512xf32>
    %cst = arith.constant dense<0.000000e+00> : vector<32x256xf32>
    %3 = tpu.matmul %2, %1, %cst {dimension_numbers = #tpu.dot_dimension_numbers<[1], [0], [0], [1], [0, 0, 1, 1], [], []>} : vector<32x512xf32>, vector<512x256xf32>, vector<32x256xf32> -> vector<32x256xf32>
    %c0_4 = arith.constant 0 : index
    %c0_5 = arith.constant 0 : index
    %4 = vector.load %arg4[%c0_4, %c0_5] : memref<32x1xf32, #tpu.memory_space<vmem>>, vector<32x1xf32>
    %5 = vector.broadcast %4 : vector<32x1xf32> to vector<32x256xf32>
    %6 = arith.addf %3, %5 : vector<32x256xf32>
    %c0_6 = arith.constant 0 : index
    %c0_7 = arith.constant 0 : index
    %c0_8 = arith.constant 0 : index
    %7 = vector.load %arg13[%c0_6, %c0_7, %c0_8] : memref<1x32x256xf32, #tpu.memory_space<vmem>>, vector<1x32x256xf32>
    %8 = vector.shape_cast %7 : vector<1x32x256xf32> to vector<32x256xf32>
    %9 = vector.shape_cast %6 : vector<32x256xf32> to vector<1x32x256xf32>
    tpu.vector_store %arg13[%c0_6, %c0_7, %c0_8], %9 {strides = array<i32>} : memref<1x32x256xf32, #tpu.memory_space<vmem>>, vector<1x32x256xf32>,
    %c0_9 = arith.constant 0 : index
    %c0_10 = arith.constant 0 : index
    %10 = vector.load %arg5[%c0_9, %c0_10] : memref<32x1xf32, #tpu.memory_space<vmem>>, vector<32x1xf32>
    %11 = vector.broadcast %10 : vector<32x1xf32> to vector<32x256xf32>
    %12 = arith.mulf %6, %11 : vector<32x256xf32>
    %c0_11 = arith.constant 0 : index
    %c0_12 = arith.constant 0 : index
    %13 = vector.load %arg6[%c0_11, %c0_12] : memref<32x1xf32, #tpu.memory_space<vmem>>, vector<32x1xf32>
    %14 = vector.broadcast %13 : vector<32x1xf32> to vector<32x256xf32>
    %15 = arith.addf %12, %14 : vector<32x256xf32>
    %cst_13 = arith.constant 0.000000e+00 : f32
    %16 = vector.broadcast %cst_13 : f32 to vector<32x256xf32>
    %17 = arith.maximumf %15, %16 : vector<32x256xf32>
    %c0_14 = arith.constant 0 : index
    %c0_15 = arith.constant 0 : index
    %18 = vector.load %arg7[%c0_14, %c0_15] : memref<16x32xf32, #tpu.memory_space<vmem>>, vector<16x32xf32>
    %cst_16 = arith.constant dense<0.000000e+00> : vector<16x256xf32>
    %19 = tpu.matmul %18, %17, %cst_16 {dimension_numbers = #tpu.dot_dimension_numbers<[1], [0], [0], [1], [0, 0, 1, 1], [], []>} : vector<16x32xf32>, vector<32x256xf32>, vector<16x256xf32> -> vector<16x256xf32>
    %c0_17 = arith.constant 0 : index
    %c0_18 = arith.constant 0 : index
    %20 = vector.load %arg8[%c0_17, %c0_18] : memref<16x1xf32, #tpu.memory_space<vmem>>, vector<16x1xf32>
    %21 = vector.broadcast %20 : vector<16x1xf32> to vector<16x256xf32>
    %22 = arith.addf %19, %21 : vector<16x256xf32>
    %c0_19 = arith.constant 0 : index
    %c0_20 = arith.constant 0 : index
    %c0_21 = arith.constant 0 : index
    %23 = vector.load %arg14[%c0_19, %c0_20, %c0_21] : memref<1x16x256xf32, #tpu.memory_space<vmem>>, vector<1x16x256xf32>
    %24 = vector.shape_cast %23 : vector<1x16x256xf32> to vector<16x256xf32>
    %25 = vector.shape_cast %22 : vector<16x256xf32> to vector<1x16x256xf32>
    tpu.vector_store %arg14[%c0_19, %c0_20, %c0_21], %25 {strides = array<i32>} : memref<1x16x256xf32, #tpu.memory_space<vmem>>, vector<1x16x256xf32>,
    %c0_22 = arith.constant 0 : index
    %c0_23 = arith.constant 0 : index
    %26 = vector.load %arg9[%c0_22, %c0_23] : memref<16x1xf32, #tpu.memory_space<vmem>>, vector<16x1xf32>
    %27 = vector.broadcast %26 : vector<16x1xf32> to vector<16x256xf32>
    %28 = arith.mulf %22, %27 : vector<16x256xf32>
    %c0_24 = arith.constant 0 : index
    %c0_25 = arith.constant 0 : index
    %29 = vector.load %arg10[%c0_24, %c0_25] : memref<16x1xf32, #tpu.memory_space<vmem>>, vector<16x1xf32>
    %30 = vector.broadcast %29 : vector<16x1xf32> to vector<16x256xf32>
    %31 = arith.addf %28, %30 : vector<16x256xf32>
    %cst_26 = arith.constant 0.000000e+00 : f32
    %32 = vector.broadcast %cst_26 : f32 to vector<16x256xf32>
    %33 = arith.maximumf %31, %32 : vector<16x256xf32>
    %c0_27 = arith.constant 0 : index
    %c0_28 = arith.constant 0 : index
    %34 = vector.load %arg11[%c0_27, %c0_28] : memref<1x16xf32, #tpu.memory_space<vmem>>, vector<1x16xf32>
    %cst_29 = arith.constant dense<0.000000e+00> : vector<1x256xf32>
    %35 = tpu.matmul %34, %33, %cst_29 {dimension_numbers = #tpu.dot_dimension_numbers<[1], [0], [0], [1], [0, 0, 1, 1], [], []>} : vector<1x16xf32>, vector<16x256xf32>, vector<1x256xf32> -> vector<1x256xf32>
    %c0_30 = arith.constant 0 : index
    %c0_31 = arith.constant 0 : index
    %36 = vector.load %arg12[%c0_30, %c0_31] : memref<1x1xf32, #tpu.memory_space<vmem>>, vector<1x1xf32>
    %37 = vector.broadcast %36 : vector<1x1xf32> to vector<1x256xf32>
    %38 = arith.addf %35, %37 : vector<1x256xf32>
    %39 = arith.negf %38 : vector<1x256xf32>
    %40 = math.exp %39 : vector<1x256xf32>
    %cst_32 = arith.constant 1.000000e+00 : f32
    %41 = vector.broadcast %cst_32 : f32 to vector<1x256xf32>
    %42 = arith.addf %41, %40 : vector<1x256xf32>
    %43 = arith.divf %41, %42 : vector<1x256xf32>
    %c0_33 = arith.constant 0 : index
    %c0_34 = arith.constant 0 : index
    %c0_35 = arith.constant 0 : index
    %44 = vector.load %arg15[%c0_33, %c0_34, %c0_35] : memref<1x1x256xf32, #tpu.memory_space<vmem>>, vector<1x1x256xf32>
    %45 = vector.shape_cast %44 : vector<1x1x256xf32> to vector<1x256xf32>
    %46 = vector.shape_cast %43 : vector<1x256xf32> to vector<1x1x256xf32>
    tpu.vector_store %arg15[%c0_33, %c0_34, %c0_35], %46 {strides = array<i32>} : memref<1x1x256xf32, #tpu.memory_space<vmem>>, vector<1x1x256xf32>,
    return
  }
  func.func @transform_0(%arg0: i32, %arg1: i32) -> (i32, i32, i32) {
    %c0_i32 = arith.constant 0 : i32
    %c0_i32_0 = arith.constant 0 : i32
    return %arg0, %c0_i32, %arg1 : i32, i32, i32
  }
  func.func @transform_1(%arg0: i32, %arg1: i32) -> (i32, i32) {
    %c0_i32 = arith.constant 0 : i32
    %c0_i32_0 = arith.constant 0 : i32
    %c0_i32_1 = arith.constant 0 : i32
    return %c0_i32, %c0_i32_0 : i32, i32
  }
  func.func @transform_2(%arg0: i32, %arg1: i32) -> (i32, i32) {
    %c0_i32 = arith.constant 0 : i32
    %c0_i32_0 = arith.constant 0 : i32
    %c0_i32_1 = arith.constant 0 : i32
    return %c0_i32, %c0_i32_0 : i32, i32
  }
  func.func @transform_3(%arg0: i32, %arg1: i32) -> (i32, i32) {
    %c0_i32 = arith.constant 0 : i32
    %c0_i32_0 = arith.constant 0 : i32
    %c0_i32_1 = arith.constant 0 : i32
    return %c0_i32, %c0_i32_0 : i32, i32
  }
  func.func @transform_4(%arg0: i32, %arg1: i32) -> (i32, i32) {
    %c0_i32 = arith.constant 0 : i32
    %c0_i32_0 = arith.constant 0 : i32
    %c0_i32_1 = arith.constant 0 : i32
    return %c0_i32, %c0_i32_0 : i32, i32
  }
  func.func @transform_5(%arg0: i32, %arg1: i32) -> (i32, i32) {
    %c0_i32 = arith.constant 0 : i32
    %c0_i32_0 = arith.constant 0 : i32
    %c0_i32_1 = arith.constant 0 : i32
    return %c0_i32, %c0_i32_0 : i32, i32
  }
  func.func @transform_6(%arg0: i32, %arg1: i32) -> (i32, i32) {
    %c0_i32 = arith.constant 0 : i32
    %c0_i32_0 = arith.constant 0 : i32
    %c0_i32_1 = arith.constant 0 : i32
    return %c0_i32, %c0_i32_0 : i32, i32
  }
  func.func @transform_7(%arg0: i32, %arg1: i32) -> (i32, i32) {
    %c0_i32 = arith.constant 0 : i32
    %c0_i32_0 = arith.constant 0 : i32
    %c0_i32_1 = arith.constant 0 : i32
    return %c0_i32, %c0_i32_0 : i32, i32
  }
  func.func @transform_8(%arg0: i32, %arg1: i32) -> (i32, i32) {
    %c0_i32 = arith.constant 0 : i32
    %c0_i32_0 = arith.constant 0 : i32
    %c0_i32_1 = arith.constant 0 : i32
    return %c0_i32, %c0_i32_0 : i32, i32
  }
  func.func @transform_9(%arg0: i32, %arg1: i32) -> (i32, i32) {
    %c0_i32 = arith.constant 0 : i32
    %c0_i32_0 = arith.constant 0 : i32
    %c0_i32_1 = arith.constant 0 : i32
    return %c0_i32, %c0_i32_0 : i32, i32
  }
  func.func @transform_10(%arg0: i32, %arg1: i32) -> (i32, i32) {
    %c0_i32 = arith.constant 0 : i32
    %c0_i32_0 = arith.constant 0 : i32
    %c0_i32_1 = arith.constant 0 : i32
    return %c0_i32, %c0_i32_0 : i32, i32
  }
  func.func @transform_11(%arg0: i32, %arg1: i32) -> (i32, i32, i32) {
    %c0_i32 = arith.constant 0 : i32
    %c0_i32_0 = arith.constant 0 : i32
    return %arg0, %c0_i32, %arg1 : i32, i32, i32
  }
  func.func @transform_12(%arg0: i32, %arg1: i32) -> (i32, i32, i32) {
    %c0_i32 = arith.constant 0 : i32
    %c0_i32_0 = arith.constant 0 : i32
    return %arg0, %c0_i32, %arg1 : i32, i32, i32
  }
  func.func @transform_13(%arg0: i32, %arg1: i32) -> (i32, i32, i32) {
    %c0_i32 = arith.constant 0 : i32
    %c0_i32_0 = arith.constant 0 : i32
    return %arg0, %c0_i32, %arg1 : i32, i32, i32
  }
}

</mosaic_0001>

<llo_original>
// kernel: normal_head_forward.1
$region0: #{normal_head_forward.1}
  #allocation0 [shape = 'u32[]', space=smem, size = 0x4, offset = 0x4, fixed_abs, tag = 'smem constant byte address 0x4 - core index']
  #allocation1 [shape = 'u32[144,128]{1,0:T(1,128)}', space=vmem, size = 0x12000, scoped, tag = 'internal scratch']
  #allocation2 [shape = 'f32[1,1]{1,0:T(1,128)S(1)}', space=vmem, size = 0x200, scoped, tag = 'scoped memory for normal_head_forward.1']
  %s0 = inlined_call_operand.vmem [shape: f32[2,512,256], index: 0, kind: input, shape index: {}]
  %s1 = inlined_call_operand.vmem [shape: f32[32,512], index: 1, kind: input, shape index: {}]
  %s2 = inlined_call_operand.vmem [shape: f32[32,1], index: 2, kind: input, shape index: {}]
  %s3 = inlined_call_operand.vmem [shape: f32[32,1], index: 3, kind: input, shape index: {}]
  %s4 = inlined_call_operand.vmem [shape: f32[32,1], index: 4, kind: input, shape index: {}]
  %s5 = inlined_call_operand.vmem [shape: f32[16,32], index: 5, kind: input, shape index: {}]
  %s6 = inlined_call_operand.vmem [shape: f32[16,1], index: 6, kind: input, shape index: {}]
  %s7 = inlined_call_operand.vmem [shape: f32[16,1], index: 7, kind: input, shape index: {}]
  %s8 = inlined_call_operand.vmem [shape: f32[16,1], index: 8, kind: input, shape index: {}]
  %s9 = inlined_call_operand.vmem [shape: f32[1,16], index: 9, kind: input, shape index: {}]
  %s10 = inlined_call_operand.<no memory space> [shape: f32[1,1], index: 10, kind: input, shape index: {}]
  %s11 = inlined_call_operand.hbm [shape: f32[2,32,256], index: 11, kind: output, shape index: {0}]
  %s12 = inlined_call_operand.hbm [shape: f32[2,16,256], index: 12, kind: output, shape index: {1}]
  %s13 = inlined_call_operand.hbm [shape: f32[2,1,256], index: 13, kind: output, shape index: {2}]
  %14 = xla_tuple %s11, %s12, %s13
  %s15 = sld [smem:[#allocation0]]
  $region93: #{normal_head_forward.1} parent=0
    _
  %s17 = ssub.s32 1, %s15
  %s18 = scalar_select 0, %s17, %s15
  %v19 = vstv %s10
  %20 = vst [vmem:[#allocation2] sm:$0x1] %v19
  $region1: #{normal_head_forward.1} parent=0
    #allocation3 [shape = 'u8[65536]{0}', space=vmem, size = 0x10000, scoped, tag = 'output window, operand 0']
    #allocation4 [shape = 's32[2]{0}', space=sflag, size = 0x8, scoped, tag = 'scoped memory for normal_head_forward.1']
    #allocation5 [shape = 'u8[32768]{0}', space=vmem, size = 0x8000, scoped, tag = 'output window, operand 1']
    #allocation6 [shape = 's32[2]{0}', space=sflag, size = 0x8, scoped, tag = 'scoped memory for normal_head_forward.1']
    #allocation7 [shape = 'u8[2048]{0}', space=vmem, size = 0x800, scoped, tag = 'output window, operand 2']
    %21 = vsyncpa [#allocation4], 0
    %s22 = scalar_lea.sflag [#allocation4], 1
    %23 = vsyncpa %s22, 0
    %24 = vsyncpa [#allocation6], 0
    %s25 = scalar_lea.sflag [#allocation6], 1
    %26 = vsyncpa %s25, 0
    loop: start=0, step=1, limit=4
    $region2: #{normal_head_forward.1} parent=1 // loop_pre_header
      _
    $region3: #{normal_head_forward.1} parent=1 // loop_header
      %s28 = sphi 0, %s32
      %p29 = scmp.ge.s32.totalorder %s28, 4
      %s35 = sphi 0, %s47
      %s36 = sphi 0, %s43
      %s37 = sphi 0, %s35
      %s38 = sphi 0, %s36
      %s39 = sphi 0, %s37
      %s40 = sphi 0, %s38
      %s52 = sphi 0, %s54
      %s55 = sphi 0, %s52
      %s56 = sphi 0, %s55
      %s72 = sphi 0, %s56
      %s76 = sphi 0, %s76
      %s78 = sphi 0, %s76
      %s79 = sphi 0, %s78
      %s93 = sphi 0, %s79
      %s97 = sphi 0, %s97
      %s99 = sphi 0, %s97
      %s100 = sphi 0, %s99
      %s114 = sphi 0, %s100
      %s118 = sphi 0, %s118
      %s120 = sphi 0, %s118
      %s121 = sphi 0, %s120
      %s135 = sphi 0, %s121
      %s139 = sphi 0, %s139
      %s141 = sphi 0, %s139
      %s142 = sphi 0, %s141
      %s156 = sphi 0, %s142
      %s160 = sphi 0, %s160
      %s162 = sphi 0, %s160
      %s163 = sphi 0, %s162
      %s177 = sphi 0, %s163
      %s181 = sphi 0, %s181
      %s183 = sphi 0, %s181
      %s184 = sphi 0, %s183
      %s198 = sphi 0, %s184
      %s202 = sphi 0, %s202
      %s204 = sphi 0, %s202
      %s205 = sphi 0, %s204
      %s219 = sphi 0, %s205
      %s223 = sphi 0, %s223
      %s225 = sphi 0, %s223
      %s226 = sphi 0, %s225
      %s240 = sphi 0, %s226
      %s244 = sphi 0, %s244
      %s246 = sphi 0, %s244
      %s247 = sphi 0, %s246
      %s261 = sphi 0, %s247
      %s265 = sphi 0, %s265
      %s267 = sphi 0, %s265
      %s268 = sphi 0, %s267
      %s282 = sphi 0, %s268
      %s290 = sphi 0, %s292
      %s293 = sphi 0, %s290
      %s294 = sphi 0, %s293
      %s310 = sphi 0, %s294
      %s318 = sphi 0, %s320
      %s321 = sphi 0, %s318
      %s322 = sphi 0, %s321
      %s338 = sphi 0, %s322
      %s346 = sphi 0, %s348
      %s349 = sphi 0, %s346
      %s350 = sphi 0, %s349
      %s366 = sphi 0, %s350
    $region4: #{normal_head_forward.1} parent=1 // loop_header_branch
      %31 = sbr.rel (%p29) target = $region8
    $region5: #{normal_head_forward.1} parent=1 // loop_body
      %s33 = ssub.s32 %s28, 1
      %s34 = ssub.s32 %s28, 2
      %s41 = sadd.s32 1, %s36
      %p42 = scmp.ge.s32.totalorder %s41, 1
      %s43 = scalar_select %p42, 0, %s41
      %s44 = sadd.s32 1, %s35
      %s45 = scalar_select %p42, %s44, %s35
      %p46 = scmp.ge.s32.totalorder %s45, 2
      %s47 = scalar_select %p46, 0, %s45
      %s48 = ssub.s32 %s35, %s47
      %s49 = ssub.s32 %s36, %s43
      %s50 = sor.u32 %s48, %s49
      %p51 = scmp.eq.s32.totalorder %s50, 0
      %s53 = sadd.s32 %s52, 1
      %s54 = scalar_select %p51, %s52, %s53
      %p57 = pneg %p51
      %p58 = scmp.eq.s32.totalorder %s28, 1
      %p59 = por %p57, %p58
      %p60 = scmp.ne.s32.totalorder %s52, %s55
      %p61 = scmp.eq.s32.totalorder %s28, 0
      %p62 = por %p60, %p61
      %p63 = scmp.ne.s32.totalorder %s52, %s55
      %p64 = scmp.eq.s32.totalorder %s33, 1
      %p65 = por %p63, %p64
      %p66 = scmp.ne.s32.totalorder %s55, %s56
      %p67 = scmp.eq.s32.totalorder %s33, 0
      %p68 = por %p66, %p67
      %p69 = scmp.ne.s32.totalorder %s55, %s56
      %p70 = scmp.eq.s32.totalorder %s34, 1
      %p71 = por %p69, %p70
      %p73 = scmp.ne.s32.totalorder %s56, %s72
      %p74 = scmp.eq.s32.totalorder %s34, 0
      %p75 = por %p73, %p74
      %s77 = sadd.s32 %s76, 1
      %p80 = scmp.eq.s32.totalorder %s28, 1
      %p81 = scmp.ne.s32.totalorder %s76, %s78
      %p82 = scmp.eq.s32.totalorder %s28, 0
      %p83 = por %p81, %p82
      %p84 = scmp.ne.s32.totalorder %s76, %s78
      %p85 = scmp.eq.s32.totalorder %s33, 1
      %p86 = por %p84, %p85
      %p87 = scmp.ne.s32.totalorder %s78, %s79
      %p88 = scmp.eq.s32.totalorder %s33, 0
      %p89 = por %p87, %p88
      %p90 = scmp.ne.s32.totalorder %s78, %s79
      %p91 = scmp.eq.s32.totalorder %s34, 1
      %p92 = por %p90, %p91
      %p94 = scmp.ne.s32.totalorder %s79, %s93
      %p95 = scmp.eq.s32.totalorder %s34, 0
      %p96 = por %p94, %p95
      %s98 = sadd.s32 %s97, 1
      %p101 = scmp.eq.s32.totalorder %s28, 1
      %p102 = scmp.ne.s32.totalorder %s97, %s99
      %p103 = scmp.eq.s32.totalorder %s28, 0
      %p104 = por %p102, %p103
      %p105 = scmp.ne.s32.totalorder %s97, %s99
      %p106 = scmp.eq.s32.totalorder %s33, 1
      %p107 = por %p105, %p106
      %p108 = scmp.ne.s32.totalorder %s99, %s100
      %p109 = scmp.eq.s32.totalorder %s33, 0
      %p110 = por %p108, %p109
      %p111 = scmp.ne.s32.totalorder %s99, %s100
      %p112 = scmp.eq.s32.totalorder %s34, 1
      %p113 = por %p111, %p112
      %p115 = scmp.ne.s32.totalorder %s100, %s114
      %p116 = scmp.eq.s32.totalorder %s34, 0
      %p117 = por %p115, %p116
      %s119 = sadd.s32 %s118, 1
      %p122 = scmp.eq.s32.totalorder %s28, 1
      %p123 = scmp.ne.s32.totalorder %s118, %s120
      %p124 = scmp.eq.s32.totalorder %s28, 0
      %p125 = por %p123, %p124
      %p126 = scmp.ne.s32.totalorder %s118, %s120
      %p127 = scmp.eq.s32.totalorder %s33, 1
      %p128 = por %p126, %p127
      %p129 = scmp.ne.s32.totalorder %s120, %s121
      %p130 = scmp.eq.s32.totalorder %s33, 0
      %p131 = por %p129, %p130
      %p132 = scmp.ne.s32.totalorder %s120, %s121
      %p133 = scmp.eq.s32.totalorder %s34, 1
      %p134 = por %p132, %p133
      %p136 = scmp.ne.s32.totalorder %s121, %s135
      %p137 = scmp.eq.s32.totalorder %s34, 0
      %p138 = por %p136, %p137
      %s140 = sadd.s32 %s139, 1
      %p143 = scmp.eq.s32.totalorder %s28, 1
      %p144 = scmp.ne.s32.totalorder %s139, %s141
      %p145 = scmp.eq.s32.totalorder %s28, 0
      %p146 = por %p144, %p145
      %p147 = scmp.ne.s32.totalorder %s139, %s141
      %p148 = scmp.eq.s32.totalorder %s33, 1
      %p149 = por %p147, %p148
      %p150 = scmp.ne.s32.totalorder %s141, %s142
      %p151 = scmp.eq.s32.totalorder %s33, 0
      %p152 = por %p150, %p151
      %p153 = scmp.ne.s32.totalorder %s141, %s142
      %p154 = scmp.eq.s32.totalorder %s34, 1
      %p155 = por %p153, %p154
      %p157 = scmp.ne.s32.totalorder %s142, %s156
      %p158 = scmp.eq.s32.totalorder %s34, 0
      %p159 = por %p157, %p158
      %s161 = sadd.s32 %s160, 1
      %p164 = scmp.eq.s32.totalorder %s28, 1
      %p165 = scmp.ne.s32.totalorder %s160, %s162
      %p166 = scmp.eq.s32.totalorder %s28, 0
      %p167 = por %p165, %p166
      %p168 = scmp.ne.s32.totalorder %s160, %s162
      %p169 = scmp.eq.s32.totalorder %s33, 1
      %p170 = por %p168, %p169
      %p171 = scmp.ne.s32.totalorder %s162, %s163
      %p172 = scmp.eq.s32.totalorder %s33, 0
      %p173 = por %p171, %p172
      %p174 = scmp.ne.s32.totalorder %s162, %s163
      %p175 = scmp.eq.s32.totalorder %s34, 1
      %p176 = por %p174, %p175
      %p178 = scmp.ne.s32.totalorder %s163, %s177
      %p179 = scmp.eq.s32.totalorder %s34, 0
      %p180 = por %p178, %p179
      %s182 = sadd.s32 %s181, 1
      %p185 = scmp.eq.s32.totalorder %s28, 1
      %p186 = scmp.ne.s32.totalorder %s181, %s183
      %p187 = scmp.eq.s32.totalorder %s28, 0
      %p188 = por %p186, %p187
      %p189 = scmp.ne.s32.totalorder %s181, %s183
      %p190 = scmp.eq.s32.totalorder %s33, 1
      %p191 = por %p189, %p190
      %p192 = scmp.ne.s32.totalorder %s183, %s184
      %p193 = scmp.eq.s32.totalorder %s33, 0
      %p194 = por %p192, %p193
      %p195 = scmp.ne.s32.totalorder %s183, %s184
      %p196 = scmp.eq.s32.totalorder %s34, 1
      %p197 = por %p195, %p196
      %p199 = scmp.ne.s32.totalorder %s184, %s198
      %p200 = scmp.eq.s32.totalorder %s34, 0
      %p201 = por %p199, %p200
      %s203 = sadd.s32 %s202, 1
      %p206 = scmp.eq.s32.totalorder %s28, 1
      %p207 = scmp.ne.s32.totalorder %s202, %s204
      %p208 = scmp.eq.s32.totalorder %s28, 0
      %p209 = por %p207, %p208
      %p210 = scmp.ne.s32.totalorder %s202, %s204
      %p211 = scmp.eq.s32.totalorder %s33, 1
      %p212 = por %p210, %p211
      %p213 = scmp.ne.s32.totalorder %s204, %s205
      %p214 = scmp.eq.s32.totalorder %s33, 0
      %p215 = por %p213, %p214
      %p216 = scmp.ne.s32.totalorder %s204, %s205
      %p217 = scmp.eq.s32.totalorder %s34, 1
      %p218 = por %p216, %p217
      %p220 = scmp.ne.s32.totalorder %s205, %s219
      %p221 = scmp.eq.s32.totalorder %s34, 0
      %p222 = por %p220, %p221
      %s224 = sadd.s32 %s223, 1
      %p227 = scmp.eq.s32.totalorder %s28, 1
      %p228 = scmp.ne.s32.totalorder %s223, %s225
      %p229 = scmp.eq.s32.totalorder %s28, 0
      %p230 = por %p228, %p229
      %p231 = scmp.ne.s32.totalorder %s223, %s225
      %p232 = scmp.eq.s32.totalorder %s33, 1
      %p233 = por %p231, %p232
      %p234 = scmp.ne.s32.totalorder %s225, %s226
      %p235 = scmp.eq.s32.totalorder %s33, 0
      %p236 = por %p234, %p235
      %p237 = scmp.ne.s32.totalorder %s225, %s226
      %p238 = scmp.eq.s32.totalorder %s34, 1
      %p239 = por %p237, %p238
      %p241 = scmp.ne.s32.totalorder %s226, %s240
      %p242 = scmp.eq.s32.totalorder %s34, 0
      %p243 = por %p241, %p242
      %s245 = sadd.s32 %s244, 1
      %p248 = scmp.eq.s32.totalorder %s28, 1
      %p249 = scmp.ne.s32.totalorder %s244, %s246
      %p250 = scmp.eq.s32.totalorder %s28, 0
      %p251 = por %p249, %p250
      %p252 = scmp.ne.s32.totalorder %s244, %s246
      %p253 = scmp.eq.s32.totalorder %s33, 1
      %p254 = por %p252, %p253
      %p255 = scmp.ne.s32.totalorder %s246, %s247
      %p256 = scmp.eq.s32.totalorder %s33, 0
      %p257 = por %p255, %p256
      %p258 = scmp.ne.s32.totalorder %s246, %s247
      %p259 = scmp.eq.s32.totalorder %s34, 1
      %p260 = por %p258, %p259
      %p262 = scmp.ne.s32.totalorder %s247, %s261
      %p263 = scmp.eq.s32.totalorder %s34, 0
      %p264 = por %p262, %p263
      %s266 = sadd.s32 %s265, 1
      %p269 = scmp.eq.s32.totalorder %s28, 1
      %p270 = scmp.ne.s32.totalorder %s265, %s267
      %p271 = scmp.eq.s32.totalorder %s28, 0
      %p272 = por %p270, %p271
      %p273 = scmp.ne.s32.totalorder %s265, %s267
      %p274 = scmp.eq.s32.totalorder %s33, 1
      %p275 = por %p273, %p274
      %p276 = scmp.ne.s32.totalorder %s267, %s268
      %p277 = scmp.eq.s32.totalorder %s33, 0
      %p278 = por %p276, %p277
      %p279 = scmp.ne.s32.totalorder %s267, %s268
      %p280 = scmp.eq.s32.totalorder %s34, 1
      %p281 = por %p279, %p280
      %p283 = scmp.ne.s32.totalorder %s268, %s282
      %p284 = scmp.eq.s32.totalorder %s34, 0
      %p285 = por %p283, %p284
      %s286 = ssub.s32 %s35, %s47
      %s287 = ssub.s32 %s36, %s43
      %s288 = sor.u32 %s286, %s287
      %p289 = scmp.eq.s32.totalorder %s288, 0
      %s291 = sadd.s32 %s290, 1
      %s292 = scalar_select %p289, %s290, %s291
      %p295 = pneg %p289
      %p296 = scmp.eq.s32.totalorder %s28, 1
      %p297 = por %p295, %p296
      %p298 = scmp.ne.s32.totalorder %s290, %s293
      %p299 = scmp.eq.s32.totalorder %s28, 0
      %p300 = por %p298, %p299
      %p301 = scmp.ne.s32.totalorder %s290, %s293
      %p302 = scmp.eq.s32.totalorder %s33, 1
      %p303 = por %p301, %p302
      %p304 = scmp.ne.s32.totalorder %s293, %s294
      %p305 = scmp.eq.s32.totalorder %s33, 0
      %p306 = por %p304, %p305
      %p307 = scmp.ne.s32.totalorder %s293, %s294
      %p308 = scmp.eq.s32.totalorder %s34, 1
      %p309 = por %p307, %p308
      %p311 = scmp.ne.s32.totalorder %s294, %s310
      %p312 = scmp.eq.s32.totalorder %s34, 0
      %p313 = por %p311, %p312
      %s314 = ssub.s32 %s35, %s47
      %s315 = ssub.s32 %s36, %s43
      %s316 = sor.u32 %s314, %s315
      %p317 = scmp.eq.s32.totalorder %s316, 0
      %s319 = sadd.s32 %s318, 1
      %s320 = scalar_select %p317, %s318, %s319
      %p323 = pneg %p317
      %p324 = scmp.eq.s32.totalorder %s28, 1
      %p325 = por %p323, %p324
      %p326 = scmp.ne.s32.totalorder %s318, %s321
      %p327 = scmp.eq.s32.totalorder %s28, 0
      %p328 = por %p326, %p327
      %p329 = scmp.ne.s32.totalorder %s318, %s321
      %p330 = scmp.eq.s32.totalorder %s33, 1
      %p331 = por %p329, %p330
      %p332 = scmp.ne.s32.totalorder %s321, %s322
      %p333 = scmp.eq.s32.totalorder %s33, 0
      %p334 = por %p332, %p333
      %p335 = scmp.ne.s32.totalorder %s321, %s322
      %p336 = scmp.eq.s32.totalorder %s34, 1
      %p337 = por %p335, %p336
      %p339 = scmp.ne.s32.totalorder %s322, %s338
      %p340 = scmp.eq.s32.totalorder %s34, 0
      %p341 = por %p339, %p340
      %s342 = ssub.s32 %s35, %s47
      %s343 = ssub.s32 %s36, %s43
      %s344 = sor.u32 %s342, %s343
      %p345 = scmp.eq.s32.totalorder %s344, 0
      %s347 = sadd.s32 %s346, 1
      %s348 = scalar_select %p345, %s346, %s347
      %p351 = pneg %p345
      %p352 = scmp.eq.s32.totalorder %s28, 1
      %p353 = por %p351, %p352
      %p354 = scmp.ne.s32.totalorder %s346, %s349
      %p355 = scmp.eq.s32.totalorder %s28, 0
      %p356 = por %p354, %p355
      %p357 = scmp.ne.s32.totalorder %s346, %s349
      %p358 = scmp.eq.s32.totalorder %s33, 1
      %p359 = por %p357, %p358
      %p360 = scmp.ne.s32.totalorder %s349, %s350
      %p361 = scmp.eq.s32.totalorder %s33, 0
      %p362 = por %p360, %p361
      %p363 = scmp.ne.s32.totalorder %s349, %s350
      %p364 = scmp.eq.s32.totalorder %s34, 1
      %p365 = por %p363, %p364
      %p367 = scmp.ne.s32.totalorder %s350, %s366
      %p368 = scmp.eq.s32.totalorder %s34, 0
      %p369 = por %p367, %p368
      %p370 = scmp.le.s32.totalorder 1, %s28
      %p371 = scmp.lt.s32.totalorder %s28, 3
      %p372 = pnand %p370, %p371
      %p373 = pneg %p372
      // Predicated region
      $region9: #{normal_head_forward.1} parent=5 // pred_check
        _
      $region10: #{normal_head_forward.1} parent=5 // pred_check_branch
        %375 = sbr.rel (%p372) target = $region12
      $region11: #{normal_head_forward.1} parent=5 // pred_region
        %s376 = ssub.s32 %s28, 1
        // Predicated region
        $region13: #{normal_head_forward.1} parent=11 // pred_check
          %p377 = pneg %p89
        $region14: #{normal_head_forward.1} parent=11 // pred_check_branch
          %379 = sbr.rel (%p377) target = $region16
        $region15: #{normal_head_forward.1} parent=11 // pred_region
          _
        $region16: #{normal_head_forward.1} parent=11 // pred_fallthru
          _
        // Predicated region
        $region17: #{normal_head_forward.1} parent=11 // pred_check
          %p380 = pneg %p110
        $region18: #{normal_head_forward.1} parent=11 // pred_check_branch
          %382 = sbr.rel (%p380) target = $region20
        $region19: #{normal_head_forward.1} parent=11 // pred_region
          _
        $region20: #{normal_head_forward.1} parent=11 // pred_fallthru
          _
        // Predicated region
        $region21: #{normal_head_forward.1} parent=11 // pred_check
          %p383 = pneg %p131
        $region22: #{normal_head_forward.1} parent=11 // pred_check_branch
          %385 = sbr.rel (%p383) target = $region24
        $region23: #{normal_head_forward.1} parent=11 // pred_region
          _
        $region24: #{normal_head_forward.1} parent=11 // pred_fallthru
          _
        // Predicated region
        $region25: #{normal_head_forward.1} parent=11 // pred_check
          %p386 = pneg %p152
        $region26: #{normal_head_forward.1} parent=11 // pred_check_branch
          %388 = sbr.rel (%p386) target = $region28
        $region27: #{normal_head_forward.1} parent=11 // pred_region
          _
        $region28: #{normal_head_forward.1} parent=11 // pred_fallthru
          _
        // Predicated region
        $region29: #{normal_head_forward.1} parent=11 // pred_check
          %p389 = pneg %p173
        $region30: #{normal_head_forward.1} parent=11 // pred_check_branch
          %391 = sbr.rel (%p389) target = $region32
        $region31: #{normal_head_forward.1} parent=11 // pred_region
          _
        $region32: #{normal_head_forward.1} parent=11 // pred_fallthru
          _
        // Predicated region
        $region33: #{normal_head_forward.1} parent=11 // pred_check
          %p392 = pneg %p194
        $region34: #{normal_head_forward.1} parent=11 // pred_check_branch
          %394 = sbr.rel (%p392) target = $region36
        $region35: #{normal_head_forward.1} parent=11 // pred_region
          _
        $region36: #{normal_head_forward.1} parent=11 // pred_fallthru
          _
        // Predicated region
        $region37: #{normal_head_forward.1} parent=11 // pred_check
          %p395 = pneg %p215
        $region38: #{normal_head_forward.1} parent=11 // pred_check_branch
          %397 = sbr.rel (%p395) target = $region40
        $region39: #{normal_head_forward.1} parent=11 // pred_region
          _
        $region40: #{normal_head_forward.1} parent=11 // pred_fallthru
          _
        // Predicated region
        $region41: #{normal_head_forward.1} parent=11 // pred_check
          %p398 = pneg %p236
        $region42: #{normal_head_forward.1} parent=11 // pred_check_branch
          %400 = sbr.rel (%p398) target = $region44
        $region43: #{normal_head_forward.1} parent=11 // pred_region
          _
        $region44: #{normal_head_forward.1} parent=11 // pred_fallthru
          _
        // Predicated region
        $region45: #{normal_head_forward.1} parent=11 // pred_check
          %p401 = pneg %p257
        $region46: #{normal_head_forward.1} parent=11 // pred_check_branch
          %403 = sbr.rel (%p401) target = $region48
        $region47: #{normal_head_forward.1} parent=11 // pred_region
          _
        $region48: #{normal_head_forward.1} parent=11 // pred_fallthru
          _
        // Predicated region
        $region49: #{normal_head_forward.1} parent=11 // pred_check
          %p404 = pneg %p278
        $region50: #{normal_head_forward.1} parent=11 // pred_check_branch
          %406 = sbr.rel (%p404) target = $region52
        $region51: #{normal_head_forward.1} parent=11 // pred_region
          _
        $region52: #{normal_head_forward.1} parent=11 // pred_fallthru
          _
      $region12: #{normal_head_forward.1} parent=5 // pred_fallthru
        _
      %p407 = scmp.lt.s32.totalorder %s28, 2
      // Predicated region
      $region53: #{normal_head_forward.1} parent=5 // pred_check
        %p408 = pneg %p407
      $region54: #{normal_head_forward.1} parent=5 // pred_check_branch
        %410 = sbr.rel (%p408) target = $region56
      $region55: #{normal_head_forward.1} parent=5 // pred_region
        // Predicated region
        $region57: #{normal_head_forward.1} parent=55 // pred_check
          %p411 = pneg %p62
        $region58: #{normal_head_forward.1} parent=55 // pred_check_branch
          %413 = sbr.rel (%p411) target = $region60
        $region59: #{normal_head_forward.1} parent=55 // pred_region
          %s414 = smul.u32 2, %s36
          %p415 = scmp.lt.s32.totalorder %s35, 1
          %s416 = scalar_select %p415, %s35, 1
          %p417 = scmp.lt.s32.totalorder %s414, 1
          %s418 = scalar_select %p417, %s414, 1
          %s419 = smul.addr %s416, 128
          %s420 = sadd.s32 %s418, %s419
          %s421 = smul.addr %s420, 8
          %s422 = scalar_lea.vmem %s0, %s421
          %s423 = smul.u32 2, %s36
        $region60: #{normal_head_forward.1} parent=55 // pred_fallthru
          _
      $region56: #{normal_head_forward.1} parent=5 // pred_fallthru
        _
      %p424 = scmp.le.s32.totalorder 1, %s28
      %p425 = scmp.lt.s32.totalorder %s28, 3
      %p426 = pnand %p424, %p425
      %p427 = pneg %p426
      // Predicated region
      $region61: #{normal_head_forward.1} parent=5 // pred_check
        _
      $region62: #{normal_head_forward.1} parent=5 // pred_check_branch
        %429 = sbr.rel (%p426) target = $region64
      $region63: #{normal_head_forward.1} parent=5 // pred_region
        %s430 = ssub.s32 %s28, 1
        %s431 = smul.u32 2, %s38
        %p432 = scmp.lt.s32.totalorder %s37, 1
        %s433 = scalar_select %p432, %s37, 1
        %p434 = scmp.lt.s32.totalorder %s431, 1
        %s435 = scalar_select %p434, %s431, 1
        %s436 = smul.addr %s433, 128
        %s437 = sadd.s32 %s435, %s436
        %s438 = smul.addr %s437, 8
        %s439 = scalar_lea.vmem %s0, %s438
        %p440 = pneg %p68
        %p441 = pneg %p65
        %p442 = pneg %p89
        %p443 = pneg %p86
        %p444 = pneg %p110
        %p445 = pneg %p107
        %p446 = pneg %p131
        %p447 = pneg %p128
        %p448 = pneg %p152
        %p449 = pneg %p149
        %p450 = pneg %p173
        %p451 = pneg %p170
        %p452 = pneg %p194
        %p453 = pneg %p191
        %p454 = pneg %p215
        %p455 = pneg %p212
        %p456 = pneg %p236
        %p457 = pneg %p233
        %p458 = pneg %p257
        %p459 = pneg %p254
        %p460 = pneg %p278
        %p461 = pneg %p275
        %p462 = pneg %p306
        %p463 = pneg %p303
        %s464 = sand.u32 %s293, 1
        %s465 = scalar_lea.sflag [#allocation4], %s464
        %s466 = sand.u32 %s293, 1
        %s467 = smul.addr %s466, 64
        %s468 = scalar_lea.vmem [#allocation3], %s467
        %p469 = pneg %p334
        %p470 = pneg %p331
        %s471 = sand.u32 %s33, 1
        %s472 = scalar_lea.sflag [#allocation6], %s471
        %s473 = sand.u32 %s321, 1
        %s474 = smul.addr %s473, 32
        %s475 = scalar_lea.vmem [#allocation5], %s474
        %p476 = pneg %p362
        %p477 = pneg %p359
        %s478 = sand.u32 %s33, 1
        %s479 = scalar_lea.sflag [#allocation6], %s478
        %s480 = sand.u32 %s349, 1
        %s481 = smul.addr %s480, 2
        %s482 = scalar_lea.vmem [#allocation7], %s481
        %s483 = smul.u32 2, %s38
        %p484 = scmp.lt.s32.totalorder %s37, 1
        %s485 = scalar_select %p484, %s37, 1
        %p486 = scmp.lt.s32.totalorder %s483, 1
        %s487 = scalar_select %p486, %s483, 1
        %s488 = smul.addr %s485, 128
        %s489 = sadd.s32 %s487, %s488
        %s490 = smul.addr %s489, 8
        %s491 = scalar_lea.vmem %s0, %s490
        %s492 = smul.u32 2, %s38
        %s493 = smul.u32 2, %s38
        %s494 = smul.u32 2, %s38
        %s495 = smul.u32 2, %s38
        %v496 = vld [vmem:[%s491] sm:$0xff]
        %v497 = vld [vmem:[%s491 + $0x8] sm:$0xff]
        %v498 = vld [vmem:[%s491 + $0x10] sm:$0xff]
        %v499 = vld [vmem:[%s491 + $0x18] sm:$0xff]
        %v500 = vld [vmem:[%s491 + $0x20] sm:$0xff]
        %v501 = vld [vmem:[%s491 + $0x28] sm:$0xff]
        %v502 = vld [vmem:[%s491 + $0x30] sm:$0xff]
        %v503 = vld [vmem:[%s491 + $0x38] sm:$0xff]
        %v504 = vld [vmem:[%s491 + $0x40] sm:$0xff]
        %v505 = vld [vmem:[%s491 + $0x48] sm:$0xff]
        %v506 = vld [vmem:[%s491 + $0x50] sm:$0xff]
        %v507 = vld [vmem:[%s491 + $0x58] sm:$0xff]
        %v508 = vld [vmem:[%s491 + $0x60] sm:$0xff]
        %v509 = vld [vmem:[%s491 + $0x68] sm:$0xff]
        %v510 = vld [vmem:[%s491 + $0x70] sm:$0xff]
        %v511 = vld [vmem:[%s491 + $0x78] sm:$0xff]
        %v512 = vld [vmem:[%s491 + $0x80] sm:$0xff]
        %v513 = vld [vmem:[%s491 + $0x88] sm:$0xff]
        %v514 = vld [vmem:[%s491 + $0x90] sm:$0xff]
        %v515 = vld [vmem:[%s491 + $0x98] sm:$0xff]
        %v516 = vld [vmem:[%s491 + $0xa0] sm:$0xff]
        %v517 = vld [vmem:[%s491 + $0xa8] sm:$0xff]
        %v518 = vld [vmem:[%s491 + $0xb0] sm:$0xff]
        %v519 = vld [vmem:[%s491 + $0xb8] sm:$0xff]
        %v520 = vld [vmem:[%s491 + $0xc0] sm:$0xff]
        %v521 = vld [vmem:[%s491 + $0xc8] sm:$0xff]
        %v522 = vld [vmem:[%s491 + $0xd0] sm:$0xff]
        %v523 = vld [vmem:[%s491 + $0xd8] sm:$0xff]
        %v524 = vld [vmem:[%s491 + $0xe0] sm:$0xff]
        %v525 = vld [vmem:[%s491 + $0xe8] sm:$0xff]
        %v526 = vld [vmem:[%s491 + $0xf0] sm:$0xff]
        %v527 = vld [vmem:[%s491 + $0xf8] sm:$0xff]
        %v528 = vld [vmem:[%s491 + $0x100] sm:$0xff]
        %v529 = vld [vmem:[%s491 + $0x108] sm:$0xff]
        %v530 = vld [vmem:[%s491 + $0x110] sm:$0xff]
        %v531 = vld [vmem:[%s491 + $0x118] sm:$0xff]
        %v532 = vld [vmem:[%s491 + $0x120] sm:$0xff]
        %v533 = vld [vmem:[%s491 + $0x128] sm:$0xff]
        %v534 = vld [vmem:[%s491 + $0x130] sm:$0xff]
        %v535 = vld [vmem:[%s491 + $0x138] sm:$0xff]
        %v536 = vld [vmem:[%s491 + $0x140] sm:$0xff]
        %v537 = vld [vmem:[%s491 + $0x148] sm:$0xff]
        %v538 = vld [vmem:[%s491 + $0x150] sm:$0xff]
        %v539 = vld [vmem:[%s491 + $0x158] sm:$0xff]
        %v540 = vld [vmem:[%s491 + $0x160] sm:$0xff]
        %v541 = vld [vmem:[%s491 + $0x168] sm:$0xff]
        %v542 = vld [vmem:[%s491 + $0x170] sm:$0xff]
        %v543 = vld [vmem:[%s491 + $0x178] sm:$0xff]
        %v544 = vld [vmem:[%s491 + $0x180] sm:$0xff]
        %v545 = vld [vmem:[%s491 + $0x188] sm:$0xff]
        %v546 = vld [vmem:[%s491 + $0x190] sm:$0xff]
        %v547 = vld [vmem:[%s491 + $0x198] sm:$0xff]
        %v548 = vld [vmem:[%s491 + $0x1a0] sm:$0xff]
        %v549 = vld [vmem:[%s491 + $0x1a8] sm:$0xff]
        %v550 = vld [vmem:[%s491 + $0x1b0] sm:$0xff]
        %v551 = vld [vmem:[%s491 + $0x1b8] sm:$0xff]
        %v552 = vld [vmem:[%s491 + $0x1c0] sm:$0xff]
        %v553 = vld [vmem:[%s491 + $0x1c8] sm:$0xff]
        %v554 = vld [vmem:[%s491 + $0x1d0] sm:$0xff]
        %v555 = vld [vmem:[%s491 + $0x1d8] sm:$0xff]
        %v556 = vld [vmem:[%s491 + $0x1e0] sm:$0xff]
        %v557 = vld [vmem:[%s491 + $0x1e8] sm:$0xff]
        %v558 = vld [vmem:[%s491 + $0x1f0] sm:$0xff]
        %v559 = vld [vmem:[%s491 + $0x1f8] sm:$0xff]
        %v560 = vld [vmem:[%s491 + $0x200] sm:$0xff]
        %v561 = vld [vmem:[%s491 + $0x208] sm:$0xff]
        %v562 = vld [vmem:[%s491 + $0x210] sm:$0xff]
        %v563 = vld [vmem:[%s491 + $0x218] sm:$0xff]
        %v564 = vld [vmem:[%s491 + $0x220] sm:$0xff]
        %v565 = vld [vmem:[%s491 + $0x228] sm:$0xff]
        %v566 = vld [vmem:[%s491 + $0x230] sm:$0xff]
        %v567 = vld [vmem:[%s491 + $0x238] sm:$0xff]
        %v568 = vld [vmem:[%s491 + $0x240] sm:$0xff]
        %v569 = vld [vmem:[%s491 + $0x248] sm:$0xff]
        %v570 = vld [vmem:[%s491 + $0x250] sm:$0xff]
        %v571 = vld [vmem:[%s491 + $0x258] sm:$0xff]
        %v572 = vld [vmem:[%s491 + $0x260] sm:$0xff]
        %v573 = vld [vmem:[%s491 + $0x268] sm:$0xff]
        %v574 = vld [vmem:[%s491 + $0x270] sm:$0xff]
        %v575 = vld [vmem:[%s491 + $0x278] sm:$0xff]
        %v576 = vld [vmem:[%s491 + $0x280] sm:$0xff]
        %v577 = vld [vmem:[%s491 + $0x288] sm:$0xff]
        %v578 = vld [vmem:[%s491 + $0x290] sm:$0xff]
        %v579 = vld [vmem:[%s491 + $0x298] sm:$0xff]
        %v580 = vld [vmem:[%s491 + $0x2a0] sm:$0xff]
        %v581 = vld [vmem:[%s491 + $0x2a8] sm:$0xff]
        %v582 = vld [vmem:[%s491 + $0x2b0] sm:$0xff]
        %v583 = vld [vmem:[%s491 + $0x2b8] sm:$0xff]
        %v584 = vld [vmem:[%s491 + $0x2c0] sm:$0xff]
        %v585 = vld [vmem:[%s491 + $0x2c8] sm:$0xff]
        %v586 = vld [vmem:[%s491 + $0x2d0] sm:$0xff]
        %v587 = vld [vmem:[%s491 + $0x2d8] sm:$0xff]
        %v588 = vld [vmem:[%s491 + $0x2e0] sm:$0xff]
        %v589 = vld [vmem:[%s491 + $0x2e8] sm:$0xff]
        %v590 = vld [vmem:[%s491 + $0x2f0] sm:$0xff]
        %v591 = vld [vmem:[%s491 + $0x2f8] sm:$0xff]
        %v592 = vld [vmem:[%s491 + $0x300] sm:$0xff]
        %v593 = vld [vmem:[%s491 + $0x308] sm:$0xff]
        %v594 = vld [vmem:[%s491 + $0x310] sm:$0xff]
        %v595 = vld [vmem:[%s491 + $0x318] sm:$0xff]
        %v596 = vld [vmem:[%s491 + $0x320] sm:$0xff]
        %v597 = vld [vmem:[%s491 + $0x328] sm:$0xff]
        %v598 = vld [vmem:[%s491 + $0x330] sm:$0xff]
        %v599 = vld [vmem:[%s491 + $0x338] sm:$0xff]
        %v600 = vld [vmem:[%s491 + $0x340] sm:$0xff]
        %v601 = vld [vmem:[%s491 + $0x348] sm:$0xff]
        %v602 = vld [vmem:[%s491 + $0x350] sm:$0xff]
        %v603 = vld [vmem:[%s491 + $0x358] sm:$0xff]
        %v604 = vld [vmem:[%s491 + $0x360] sm:$0xff]
        %v605 = vld [vmem:[%s491 + $0x368] sm:$0xff]
        %v606 = vld [vmem:[%s491 + $0x370] sm:$0xff]
        %v607 = vld [vmem:[%s491 + $0x378] sm:$0xff]
        %v608 = vld [vmem:[%s491 + $0x380] sm:$0xff]
        %v609 = vld [vmem:[%s491 + $0x388] sm:$0xff]
        %v610 = vld [vmem:[%s491 + $0x390] sm:$0xff]
        %v611 = vld [vmem:[%s491 + $0x398] sm:$0xff]
        %v612 = vld [vmem:[%s491 + $0x3a0] sm:$0xff]
        %v613 = vld [vmem:[%s491 + $0x3a8] sm:$0xff]
        %v614 = vld [vmem:[%s491 + $0x3b0] sm:$0xff]
        %v615 = vld [vmem:[%s491 + $0x3b8] sm:$0xff]
        %v616 = vld [vmem:[%s491 + $0x3c0] sm:$0xff]
        %v617 = vld [vmem:[%s491 + $0x3c8] sm:$0xff]
        %v618 = vld [vmem:[%s491 + $0x3d0] sm:$0xff]
        %v619 = vld [vmem:[%s491 + $0x3d8] sm:$0xff]
        %v620 = vld [vmem:[%s491 + $0x3e0] sm:$0xff]
        %v621 = vld [vmem:[%s491 + $0x3e8] sm:$0xff]
        %v622 = vld [vmem:[%s491 + $0x3f0] sm:$0xff]
        %v623 = vld [vmem:[%s491 + $0x3f8] sm:$0xff]
        %v624 = vld [vmem:[%s1] sm:$0xff]
        %v625 = vld [vmem:[%s1 + $0x8] sm:$0xff]
        %v626 = vld [vmem:[%s1 + $0x10] sm:$0xff]
        %v627 = vld [vmem:[%s1 + $0x18] sm:$0xff]
        %v628 = vld [vmem:[%s1 + $0x20] sm:$0xff]
        %v629 = vld [vmem:[%s1 + $0x28] sm:$0xff]
        %v630 = vld [vmem:[%s1 + $0x30] sm:$0xff]
        %v631 = vld [vmem:[%s1 + $0x38] sm:$0xff]
        %v632 = vld [vmem:[%s1 + $0x40] sm:$0xff]
        %v633 = vld [vmem:[%s1 + $0x48] sm:$0xff]
        %v634 = vld [vmem:[%s1 + $0x50] sm:$0xff]
        %v635 = vld [vmem:[%s1 + $0x58] sm:$0xff]
        %v636 = vld [vmem:[%s1 + $0x60] sm:$0xff]
        %v637 = vld [vmem:[%s1 + $0x68] sm:$0xff]
        %v638 = vld [vmem:[%s1 + $0x70] sm:$0xff]
        %v639 = vld [vmem:[%s1 + $0x78] sm:$0xff]
        %v640 = vld [vmem:[%s2] sm:$0xff]
        %v641 = vld [vmem:[%s2 + $0x8] sm:$0xff]
        %v642 = vld [vmem:[%s2 + $0x10] sm:$0xff]
        %v643 = vld [vmem:[%s2 + $0x18] sm:$0xff]
        %645 = vset.pattern.permute.xlu0 0
        %646 = vperm.xlu0 %645, %v640
        %v647 = vpop.permute.xlu0 %646
        %650 = vset.pattern.permute.xlu0 0
        %651 = vperm.xlu0 %650, %v641
        %v652 = vpop.permute.xlu0 %651
        %655 = vset.pattern.permute.xlu0 0
        %656 = vperm.xlu0 %655, %v642
        %v657 = vpop.permute.xlu0 %656
        %660 = vset.pattern.permute.xlu0 0
        %661 = vperm.xlu0 %660, %v643
        %v662 = vpop.permute.xlu0 %661
        %664 = vmatprep.subr.mxu0 %v497
        %665 = vmatpush1.msra.mxu0 %v496
        %666 = vmatprep.subr.mxu0 %v499
        %667 = vmatpush1.msra.mxu0 %v498
        %668 = vmatprep.subr.mxu0 %v501
        %669 = vmatpush1.msra.mxu0 %v500
        %670 = vmatprep.subr.mxu0 %v503
        %671 = vmatpush1.msra.mxu0 %v502
        %672 = vmatprep.subr.mxu0 %v505
        %673 = vmatpush1.msra.mxu0 %v504
        %674 = vmatprep.subr.mxu0 %v507
        %675 = vmatpush1.msra.mxu0 %v506
        %676 = vmatprep.subr.mxu0 %v509
        %677 = vmatpush1.msra.mxu0 %v508
        %678 = vmatprep.subr.mxu0 %v511
        %679 = vmatpush1.msra.mxu0 %v510
        %680 = vmatprep.subr.mxu0 %v513
        %681 = vmatpush1.msra.mxu0 %v512
        %682 = vmatprep.subr.mxu0 %v515
        %683 = vmatpush1.msra.mxu0 %v514
        %684 = vmatprep.subr.mxu0 %v517
        %685 = vmatpush1.msra.mxu0 %v516
        %686 = vmatprep.subr.mxu0 %v519
        %687 = vmatpush1.msra.mxu0 %v518
        %688 = vmatprep.subr.mxu0 %v521
        %689 = vmatpush1.msra.mxu0 %v520
        %690 = vmatprep.subr.mxu0 %v523
        %691 = vmatpush1.msra.mxu0 %v522
        %692 = vmatprep.subr.mxu0 %v525
        %693 = vmatpush1.msra.mxu0 %v524
        %694 = vmatprep.subr.mxu0 %v527
        %695 = vmatpush1.msra.mxu0 %v526
        %696 = vmatprep.subr.mxu0 %v529
        %697 = vmatpush1.msra.mxu0 %v528
        %698 = vmatprep.subr.mxu0 %v531
        %699 = vmatpush1.msra.mxu0 %v530
        %700 = vmatprep.subr.mxu0 %v533
        %701 = vmatpush1.msra.mxu0 %v532
        %702 = vmatprep.subr.mxu0 %v535
        %703 = vmatpush1.msra.mxu0 %v534
        %704 = vmatprep.subr.mxu0 %v537
        %705 = vmatpush1.msra.mxu0 %v536
        %706 = vmatprep.subr.mxu0 %v539
        %707 = vmatpush1.msra.mxu0 %v538
        %708 = vmatprep.subr.mxu0 %v541
        %709 = vmatpush1.msra.mxu0 %v540
        %710 = vmatprep.subr.mxu0 %v543
        %711 = vmatpush1.msra.mxu0 %v542
        %712 = vmatprep.subr.mxu0 %v545
        %713 = vmatpush1.msra.mxu0 %v544
        %714 = vmatprep.subr.mxu0 %v547
        %715 = vmatpush1.msra.mxu0 %v546
        %716 = vmatprep.subr.mxu0 %v549
        %717 = vmatpush1.msra.mxu0 %v548
        %718 = vmatprep.subr.mxu0 %v551
        %719 = vmatpush1.msra.mxu0 %v550
        %720 = vmatprep.subr.mxu0 %v553
        %721 = vmatpush1.msra.mxu0 %v552
        %722 = vmatprep.subr.mxu0 %v555
        %723 = vmatpush1.msra.mxu0 %v554
        %724 = vmatprep.subr.mxu0 %v557
        %725 = vmatpush1.msra.mxu0 %v556
        %726 = vmatprep.subr.mxu0 %v559
        %727 = vmatpush1.msra.mxu0 %v558
        %728 = vmatprep.mubr.f32.mxu0 %v625
        %729 = vmatmul.mubr.f32.gmra.mrb[0].mxu0 %v624
        %v730 = vpop.f32.mrb[0].mxu0
        %v731 = vadd.f32 %v647, %v730
        %v732 = vpop.f32.mrb[0].mxu0
        %v733 = vadd.f32 %v647, %v732
        %734 = vmatprep.mubr.f32.mxu0 %v629
        %735 = vmatmul.mubr.f32.gmra.mrb[0].mxu0 %v628
        %v736 = vpop.f32.mrb[0].mxu0
        %v737 = vadd.f32 %v652, %v736
        %v738 = vpop.f32.mrb[0].mxu0
        %v739 = vadd.f32 %v652, %v738
        %740 = vmatprep.mubr.f32.mxu0 %v633
        %741 = vmatmul.mubr.f32.gmra.mrb[0].mxu0 %v632
        %v742 = vpop.f32.mrb[0].mxu0
        %v743 = vadd.f32 %v657, %v742
        %v744 = vpop.f32.mrb[0].mxu0
        %v745 = vadd.f32 %v657, %v744
        %746 = vmatprep.mubr.f32.mxu0 %v637
        %747 = vmatmul.mubr.f32.gmra.mrb[0].mxu0 %v636
        %v748 = vpop.f32.mrb[0].mxu0
        %v749 = vadd.f32 %v662, %v748
        %v750 = vpop.f32.mrb[0].mxu0
        %v751 = vadd.f32 %v662, %v750
        %752 = vdwg.mxu0
        %753 = vmatprep.subr.mxu0 %v561
        %754 = vmatpush1.msra.mxu0 %v560
        %755 = vmatprep.subr.mxu0 %v563
        %756 = vmatpush1.msra.mxu0 %v562
        %757 = vmatprep.subr.mxu0 %v565
        %758 = vmatpush1.msra.mxu0 %v564
        %759 = vmatprep.subr.mxu0 %v567
        %760 = vmatpush1.msra.mxu0 %v566
        %761 = vmatprep.subr.mxu0 %v569
        %762 = vmatpush1.msra.mxu0 %v568
        %763 = vmatprep.subr.mxu0 %v571
        %764 = vmatpush1.msra.mxu0 %v570
        %765 = vmatprep.subr.mxu0 %v573
        %766 = vmatpush1.msra.mxu0 %v572
        %767 = vmatprep.subr.mxu0 %v575
        %768 = vmatpush1.msra.mxu0 %v574
        %769 = vmatprep.subr.mxu0 %v577
        %770 = vmatpush1.msra.mxu0 %v576
        %771 = vmatprep.subr.mxu0 %v579
        %772 = vmatpush1.msra.mxu0 %v578
        %773 = vmatprep.subr.mxu0 %v581
        %774 = vmatpush1.msra.mxu0 %v580
        %775 = vmatprep.subr.mxu0 %v583
        %776 = vmatpush1.msra.mxu0 %v582
        %777 = vmatprep.subr.mxu0 %v585
        %778 = vmatpush1.msra.mxu0 %v584
        %779 = vmatprep.subr.mxu0 %v587
        %780 = vmatpush1.msra.mxu0 %v586
        %781 = vmatprep.subr.mxu0 %v589
        %782 = vmatpush1.msra.mxu0 %v588
        %783 = vmatprep.subr.mxu0 %v591
        %784 = vmatpush1.msra.mxu0 %v590
        %785 = vmatprep.subr.mxu0 %v593
        %786 = vmatpush1.msra.mxu0 %v592
        %787 = vmatprep.subr.mxu0 %v595
        %788 = vmatpush1.msra.mxu0 %v594
        %789 = vmatprep.subr.mxu0 %v597
        %790 = vmatpush1.msra.mxu0 %v596
        %791 = vmatprep.subr.mxu0 %v599
        %792 = vmatpush1.msra.mxu0 %v598
        %793 = vmatprep.subr.mxu0 %v601
        %794 = vmatpush1.msra.mxu0 %v600
        %795 = vmatprep.subr.mxu0 %v603
        %796 = vmatpush1.msra.mxu0 %v602
        %797 = vmatprep.subr.mxu0 %v605
        %798 = vmatpush1.msra.mxu0 %v604
        %799 = vmatprep.subr.mxu0 %v607
        %800 = vmatpush1.msra.mxu0 %v606
        %801 = vmatprep.subr.mxu0 %v609
        %802 = vmatpush1.msra.mxu0 %v608
        %803 = vmatprep.subr.mxu0 %v611
        %804 = vmatpush1.msra.mxu0 %v610
        %805 = vmatprep.subr.mxu0 %v613
        %806 = vmatpush1.msra.mxu0 %v612
        %807 = vmatprep.subr.mxu0 %v615
        %808 = vmatpush1.msra.mxu0 %v614
        %809 = vmatprep.subr.mxu0 %v617
        %810 = vmatpush1.msra.mxu0 %v616
        %811 = vmatprep.subr.mxu0 %v619
        %812 = vmatpush1.msra.mxu0 %v618
        %813 = vmatprep.subr.mxu0 %v621
        %814 = vmatpush1.msra.mxu0 %v620
        %815 = vmatprep.subr.mxu0 %v623
        %816 = vmatpush1.msra.mxu0 %v622
        %817 = vmatprep.mubr.f32.mxu0 %v627
        %818 = vmatmul.mubr.f32.gmra.mrb[0].mxu0 %v626
        %v819 = vpop.f32.mrb[0].mxu0
        %v820 = vadd.f32 %v731, %v819
        %v821 = vpop.f32.mrb[0].mxu0
        %v822 = vadd.f32 %v733, %v821
        %823 = vmatprep.mubr.f32.mxu0 %v631
        %824 = vmatmul.mubr.f32.gmra.mrb[0].mxu0 %v630
        %v825 = vpop.f32.mrb[0].mxu0
        %v826 = vadd.f32 %v737, %v825
        %v827 = vpop.f32.mrb[0].mxu0
        %v828 = vadd.f32 %v739, %v827
        %829 = vmatprep.mubr.f32.mxu0 %v635
        %830 = vmatmul.mubr.f32.gmra.mrb[0].mxu0 %v634
        %v831 = vpop.f32.mrb[0].mxu0
        %v832 = vadd.f32 %v743, %v831
        %v833 = vpop.f32.mrb[0].mxu0
        %v834 = vadd.f32 %v745, %v833
        %835 = vmatprep.mubr.f32.mxu0 %v639
        %836 = vmatmul.mubr.f32.gmra.mrb[0].mxu0 %v638
        %v837 = vpop.f32.mrb[0].mxu0
        %v838 = vadd.f32 %v749, %v837
        %v839 = vpop.f32.mrb[0].mxu0
        %v840 = vadd.f32 %v751, %v839
        %841 = vdwg.mxu0
        %842 = vst [vmem:[%s468] sm:$0xff] %v820
        %843 = vst [vmem:[%s468 + $0x8] sm:$0xff] %v822
        %844 = vst [vmem:[%s468 + $0x10] sm:$0xff] %v826
        %845 = vst [vmem:[%s468 + $0x18] sm:$0xff] %v828
        %846 = vst [vmem:[%s468 + $0x20] sm:$0xff] %v832
        %847 = vst [vmem:[%s468 + $0x28] sm:$0xff] %v834
        %848 = vst [vmem:[%s468 + $0x30] sm:$0xff] %v838
        %849 = vst [vmem:[%s468 + $0x38] sm:$0xff] %v840
        %v850 = vld [vmem:[%s3] sm:$0xff]
        %v851 = vld [vmem:[%s3 + $0x8] sm:$0xff]
        %v852 = vld [vmem:[%s3 + $0x10] sm:$0xff]
        %v853 = vld [vmem:[%s3 + $0x18] sm:$0xff]
        %855 = vset.pattern.permute.xlu0 0
        %856 = vperm.xlu0 %855, %v850
        %v857 = vpop.permute.xlu0 %856
        %860 = vset.pattern.permute.xlu0 0
        %861 = vperm.xlu0 %860, %v851
        %v862 = vpop.permute.xlu0 %861
        %865 = vset.pattern.permute.xlu0 0
        %866 = vperm.xlu0 %865, %v852
        %v867 = vpop.permute.xlu0 %866
        %870 = vset.pattern.permute.xlu0 0
        %871 = vperm.xlu0 %870, %v853
        %v872 = vpop.permute.xlu0 %871
        %v874 = vmul.f32 %v820, %v857
        %v875 = vmul.f32 %v822, %v857
        %v876 = vmul.f32 %v826, %v862
        %v877 = vmul.f32 %v828, %v862
        %v878 = vmul.f32 %v832, %v867
        %v879 = vmul.f32 %v834, %v867
        %v880 = vmul.f32 %v838, %v872
        %v881 = vmul.f32 %v840, %v872
        %v882 = vld [vmem:[%s4] sm:$0xff]
        %v883 = vld [vmem:[%s4 + $0x8] sm:$0xff]
        %v884 = vld [vmem:[%s4 + $0x10] sm:$0xff]
        %v885 = vld [vmem:[%s4 + $0x18] sm:$0xff]
        %887 = vset.pattern.permute.xlu0 0
        %888 = vperm.xlu0 %887, %v882
        %v889 = vpop.permute.xlu0 %888
        %892 = vset.pattern.permute.xlu0 0
        %893 = vperm.xlu0 %892, %v883
        %v894 = vpop.permute.xlu0 %893
        %897 = vset.pattern.permute.xlu0 0
        %898 = vperm.xlu0 %897, %v884
        %v899 = vpop.permute.xlu0 %898
        %902 = vset.pattern.permute.xlu0 0
        %903 = vperm.xlu0 %902, %v885
        %v904 = vpop.permute.xlu0 %903
        %v906 = vadd.f32 %v874, %v889
        %v907 = vadd.f32 %v875, %v889
        %v908 = vadd.f32 %v876, %v894
        %v909 = vadd.f32 %v877, %v894
        %v910 = vadd.f32 %v878, %v899
        %v911 = vadd.f32 %v879, %v899
        %v912 = vadd.f32 %v880, %v904
        %v913 = vadd.f32 %v881, %v904
        %v914 = vmax.f32 %v906, 0.0
        %v915 = vmax.f32 %v907, 0.0
        %v916 = vmax.f32 %v908, 0.0
        %v917 = vmax.f32 %v909, 0.0
        %v918 = vmax.f32 %v910, 0.0
        %v919 = vmax.f32 %v911, 0.0
        %v920 = vmax.f32 %v912, 0.0
        %v921 = vmax.f32 %v913, 0.0
        %v922 = vld [vmem:[%s5] sm:$0xff]
        %v923 = vld [vmem:[%s5 + $0x8] sm:$0xff]
        %v924 = vld [vmem:[%s6] sm:$0xff]
        %v925 = vld [vmem:[%s6 + $0x8] sm:$0xff]
        %927 = vset.pattern.permute.xlu0 0
        %928 = vperm.xlu0 %927, %v924
        %v929 = vpop.permute.xlu0 %928
        %932 = vset.pattern.permute.xlu0 0
        %933 = vperm.xlu0 %932, %v925
        %v934 = vpop.permute.xlu0 %933
        %vm936 = vcmask 261120
        %v938 = vsel %vm936, %v922, 0
        %v941 = vsel %vm936, %v923, 0
        %943 = vmatprep.subr.mxu0 %v915
        %944 = vmatpush1.msra.mxu0 %v914
        %945 = vmatprep.subr.mxu0 %v917
        %946 = vmatpush1.msra.mxu0 %v916
        %947 = vmatprep.subr.mxu0 %v919
        %948 = vmatpush1.msra.mxu0 %v918
        %949 = vmatprep.subr.mxu0 %v921
        %950 = vmatpush1.msra.mxu0 %v920
        %951 = vmatprep.subr.mxu0 0.0
        %952 = vmatpush1.msra.mxu0 0.0
        %953 = vmatprep.subr.mxu0 0.0
        %954 = vmatpush1.msra.mxu0 0.0
        %955 = vmatprep.subr.mxu0 0.0
        %956 = vmatpush1.msra.mxu0 0.0
        %957 = vmatprep.subr.mxu0 0.0
        %958 = vmatpush1.msra.mxu0 0.0
        %959 = vmatprep.subr.mxu0 0.0
        %960 = vmatpush1.msra.mxu0 0.0
        %961 = vmatprep.subr.mxu0 0.0
        %962 = vmatpush1.msra.mxu0 0.0
        %963 = vmatprep.subr.mxu0 0.0
        %964 = vmatpush1.msra.mxu0 0.0
        %965 = vmatprep.subr.mxu0 0.0
        %966 = vmatpush1.msra.mxu0 0.0
        %967 = vmatprep.subr.mxu0 0.0
        %968 = vmatpush1.msra.mxu0 0.0
        %969 = vmatprep.subr.mxu0 0.0
        %970 = vmatpush1.msra.mxu0 0.0
        %971 = vmatprep.subr.mxu0 0.0
        %972 = vmatpush1.msra.mxu0 0.0
        %973 = vmatprep.subr.mxu0 0.0
        %974 = vmatpush1.msra.mxu0 0.0
        %975 = vmatprep.subr.mxu0 0.0
        %976 = vmatpush1.msra.mxu0 0.0
        %977 = vmatprep.subr.mxu0 0.0
        %978 = vmatpush1.msra.mxu0 0.0
        %979 = vmatprep.subr.mxu0 0.0
        %980 = vmatpush1.msra.mxu0 0.0
        %981 = vmatprep.subr.mxu0 0.0
        %982 = vmatpush1.msra.mxu0 0.0
        %983 = vmatprep.subr.mxu0 0.0
        %984 = vmatpush1.msra.mxu0 0.0
        %985 = vmatprep.subr.mxu0 0.0
        %986 = vmatpush1.msra.mxu0 0.0
        %987 = vmatprep.subr.mxu0 0.0
        %988 = vmatpush1.msra.mxu0 0.0
        %989 = vmatprep.subr.mxu0 0.0
        %990 = vmatpush1.msra.mxu0 0.0
        %991 = vmatprep.subr.mxu0 0.0
        %992 = vmatpush1.msra.mxu0 0.0
        %993 = vmatprep.subr.mxu0 0.0
        %994 = vmatpush1.msra.mxu0 0.0
        %995 = vmatprep.subr.mxu0 0.0
        %996 = vmatpush1.msra.mxu0 0.0
        %997 = vmatprep.subr.mxu0 0.0
        %998 = vmatpush1.msra.mxu0 0.0
        %999 = vmatprep.subr.mxu0 0.0
        %1000 = vmatpush1.msra.mxu0 0.0
        %1001 = vmatprep.subr.mxu0 0.0
        %1002 = vmatpush1.msra.mxu0 0.0
        %1003 = vmatprep.subr.mxu0 0.0
        %1004 = vmatpush1.msra.mxu0 0.0
        %1005 = vmatprep.subr.mxu0 0.0
        %1006 = vmatpush1.msra.mxu0 0.0
        %1007 = vmatprep.mubr.f32.mxu0 0.0
        %1008 = vmatmul.mubr.f32.gmra.mrb[0].mxu0 %v938
        %v1009 = vpop.f32.mrb[0].mxu0
        %v1010 = vadd.f32 %v929, %v1009
        %v1011 = vpop.f32.mrb[0].mxu0
        %v1012 = vadd.f32 %v929, %v1011
        %1013 = vmatprep.mubr.f32.mxu0 0.0
        %1014 = vmatmul.mubr.f32.gmra.mrb[0].mxu0 %v941
        %v1015 = vpop.f32.mrb[0].mxu0
        %v1016 = vadd.f32 %v934, %v1015
        %v1017 = vpop.f32.mrb[0].mxu0
        %v1018 = vadd.f32 %v934, %v1017
        %1019 = vdwg.mxu0
        %1020 = vst [vmem:[%s475] sm:$0xff] %v1010
        %1021 = vst [vmem:[%s475 + $0x8] sm:$0xff] %v1012
        %1022 = vst [vmem:[%s475 + $0x10] sm:$0xff] %v1016
        %1023 = vst [vmem:[%s475 + $0x18] sm:$0xff] %v1018
        %v1024 = vld [vmem:[%s7] sm:$0xff]
        %v1025 = vld [vmem:[%s7 + $0x8] sm:$0xff]
        %1027 = vset.pattern.permute.xlu0 0
        %1028 = vperm.xlu0 %1027, %v1024
        %v1029 = vpop.permute.xlu0 %1028
        %1032 = vset.pattern.permute.xlu0 0
        %1033 = vperm.xlu0 %1032, %v1025
        %v1034 = vpop.permute.xlu0 %1033
        %v1036 = vmul.f32 %v1010, %v1029
        %v1037 = vmul.f32 %v1012, %v1029
        %v1038 = vmul.f32 %v1016, %v1034
        %v1039 = vmul.f32 %v1018, %v1034
        %v1040 = vld [vmem:[%s8] sm:$0xff]
        %v1041 = vld [vmem:[%s8 + $0x8] sm:$0xff]
        %1043 = vset.pattern.permute.xlu0 0
        %1044 = vperm.xlu0 %1043, %v1040
        %v1045 = vpop.permute.xlu0 %1044
        %1048 = vset.pattern.permute.xlu0 0
        %1049 = vperm.xlu0 %1048, %v1041
        %v1050 = vpop.permute.xlu0 %1049
        %v1052 = vadd.f32 %v1036, %v1045
        %v1053 = vadd.f32 %v1037, %v1045
        %v1054 = vadd.f32 %v1038, %v1050
        %v1055 = vadd.f32 %v1039, %v1050
        %v1056 = vmax.f32 %v1052, 0.0
        %v1057 = vmax.f32 %v1053, 0.0
        %v1058 = vmax.f32 %v1054, 0.0
        %v1059 = vmax.f32 %v1055, 0.0
        %v1060 = vld [vmem:[%s9] sm:$0x1]
        %v1061 = vld [vmem:[#allocation2] sm:$0x1]
        %1063 = vset.pattern.permute.xlu0 0
        %1064 = vperm.xlu0 %1063, %v1061
        %v1065 = vpop.permute.xlu0 %1064
        %v1067 = vlaneseq
        %v1068 = vshrl.u32 %v1067, 7
        %v1069 = vsub.s32 0, %v1068
        %v1070 = vrot.slane %v1065, %v1069
        %vm1071 = vcmask 130048
        %v1073 = vsel %vm1071, %v1060, 0
        %1075 = vmatprep.subr.mxu0 %v1057
        %1076 = vmatpush1.msra.mxu0 %v1056
        %1077 = vmatprep.subr.mxu0 %v1059
        %1078 = vmatpush1.msra.mxu0 %v1058
        %1079 = vmatprep.subr.mxu0 0.0
        %1080 = vmatpush1.msra.mxu0 0.0
        %1081 = vmatprep.subr.mxu0 0.0
        %1082 = vmatpush1.msra.mxu0 0.0
        %1083 = vmatprep.subr.mxu0 0.0
        %1084 = vmatpush1.msra.mxu0 0.0
        %1085 = vmatprep.subr.mxu0 0.0
        %1086 = vmatpush1.msra.mxu0 0.0
        %1087 = vmatprep.subr.mxu0 0.0
        %1088 = vmatpush1.msra.mxu0 0.0
        %1089 = vmatprep.subr.mxu0 0.0
        %1090 = vmatpush1.msra.mxu0 0.0
        %1091 = vmatprep.subr.mxu0 0.0
        %1092 = vmatpush1.msra.mxu0 0.0
        %1093 = vmatprep.subr.mxu0 0.0
        %1094 = vmatpush1.msra.mxu0 0.0
        %1095 = vmatprep.subr.mxu0 0.0
        %1096 = vmatpush1.msra.mxu0 0.0
        %1097 = vmatprep.subr.mxu0 0.0
        %1098 = vmatpush1.msra.mxu0 0.0
        %1099 = vmatprep.subr.mxu0 0.0
        %1100 = vmatpush1.msra.mxu0 0.0
        %1101 = vmatprep.subr.mxu0 0.0
        %1102 = vmatpush1.msra.mxu0 0.0
        %1103 = vmatprep.subr.mxu0 0.0
        %1104 = vmatpush1.msra.mxu0 0.0
        %1105 = vmatprep.subr.mxu0 0.0
        %1106 = vmatpush1.msra.mxu0 0.0
        %1107 = vmatprep.subr.mxu0 0.0
        %1108 = vmatpush1.msra.mxu0 0.0
        %1109 = vmatprep.subr.mxu0 0.0
        %1110 = vmatpush1.msra.mxu0 0.0
        %1111 = vmatprep.subr.mxu0 0.0
        %1112 = vmatpush1.msra.mxu0 0.0
        %1113 = vmatprep.subr.mxu0 0.0
        %1114 = vmatpush1.msra.mxu0 0.0
        %1115 = vmatprep.subr.mxu0 0.0
        %1116 = vmatpush1.msra.mxu0 0.0
        %1117 = vmatprep.subr.mxu0 0.0
        %1118 = vmatpush1.msra.mxu0 0.0
        %1119 = vmatprep.subr.mxu0 0.0
        %1120 = vmatpush1.msra.mxu0 0.0
        %1121 = vmatprep.subr.mxu0 0.0
        %1122 = vmatpush1.msra.mxu0 0.0
        %1123 = vmatprep.subr.mxu0 0.0
        %1124 = vmatpush1.msra.mxu0 0.0
        %1125 = vmatprep.subr.mxu0 0.0
        %1126 = vmatpush1.msra.mxu0 0.0
        %1127 = vmatprep.subr.mxu0 0.0
        %1128 = vmatpush1.msra.mxu0 0.0
        %1129 = vmatprep.subr.mxu0 0.0
        %1130 = vmatpush1.msra.mxu0 0.0
        %1131 = vmatprep.subr.mxu0 0.0
        %1132 = vmatpush1.msra.mxu0 0.0
        %1133 = vmatprep.subr.mxu0 0.0
        %1134 = vmatpush1.msra.mxu0 0.0
        %1135 = vmatprep.subr.mxu0 0.0
        %1136 = vmatpush1.msra.mxu0 0.0
        %1137 = vmatprep.subr.mxu0 0.0
        %1138 = vmatpush1.msra.mxu0 0.0
        %1139 = vmatprep.mubr.f32.mxu0 0.0
        %1140 = vmatmul.mubr.f32.gmra.mrb[0].mxu0 %v1073
        %v1141 = vpop.f32.mrb[0].mxu0
        %v1142 = vadd.f32 %v1070, %v1141
        %v1143 = vpop.f32.mrb[0].mxu0
        %v1144 = vadd.f32 %v1070, %v1143
        %1145 = vdwg.mxu0
        %v1146 = vxor.u32 %v1142, 2147483648
        %v1147 = vxor.u32 %v1144, 2147483648
        %v1148 = vmul.f32 %v1146, 1.442695
        %v1149 = vpow.pop %v1148
        %v1150 = vmul.f32 %v1147, 1.442695
        %v1151 = vpow.pop %v1150
        %v1152 = vadd.f32 %v1149, 1.0
        %v1153 = vadd.f32 %v1151, 1.0
        %v1154 = vrcp.pop %v1152
        %v1155 = vmul.f32 1.0, %v1154
        %v1156 = vrcp.pop %v1153
        %v1157 = vmul.f32 1.0, %v1156
        %v1160 = vcombine.low %v1155, %v1157
        %v1162 = vunpack.c.l.s4 1966171168
        %v1163 = vunpack.c.0.s8 %v1162
        %v1164 = vlaneseq
        %v1165 = vshrl.u32 %v1164, 7
        %v1166 = vsub.s32 %v1163, %v1165
        %v1167 = vrot.slane %v1160, %v1166
        %v1169 = vunpack.c.l.s4 1966171168
        %v1170 = vunpack.c.0.s8 %v1169
        %v1171 = vlaneseq
        %v1172 = vshrl.u32 %v1171, 7
        %v1173 = vsub.s32 %v1170, %v1172
        %v1174 = vrot.slane %v1167, %v1173
        %v1176 = vlaneseq
        %vm1177 = vcmp.ge.s32.totalorder %v1176, 0
        %vm1178 = vcmp.lt.s32.totalorder %v1176, 256
        %vm1179 = vmand %vm1177, %vm1178
        %1180 = vst.msk [vmem:[%s482] sm:$0x3] %vm1179, %v1174
        %s1181 = sand.u32 %s293, 1
        %s1182 = scalar_lea.sflag [#allocation4], %s1181
        %s1183 = sand.u32 %s293, 1
        %s1184 = smul.addr %s1183, 64
        %s1185 = scalar_lea.vmem [#allocation3], %s1184
        %s1186 = sand.u32 %s33, 1
        %s1187 = scalar_lea.sflag [#allocation6], %s1186
        %s1188 = sand.u32 %s321, 1
        %s1189 = smul.addr %s1188, 32
        %s1190 = scalar_lea.vmem [#allocation5], %s1189
        %s1191 = sand.u32 %s33, 1
        %s1192 = scalar_lea.sflag [#allocation6], %s1191
        %s1193 = sand.u32 %s349, 1
        %s1194 = smul.addr %s1193, 2
        %s1195 = scalar_lea.vmem [#allocation7], %s1194
        // Predicated region
        $region65: #{normal_head_forward.1} parent=63 // pred_check
          %p1196 = pneg %p303
        $region66: #{normal_head_forward.1} parent=63 // pred_check_branch
          %1198 = sbr.rel (%p1196) target = $region68
        $region67: #{normal_head_forward.1} parent=63 // pred_region
          %s1199 = smul.u32 2, %s38
          %s1201 = ssub.s32 1024, 1024
          %1202 = vsyncadd %s1182, %s1201
          %s1203 = smul.addr %s37, 8
          %s1204 = sadd.s32 %s1199, %s1203
          %s1205 = smul.addr %s1204, 128
          %s1206 = scalar_lea.hbm %s11, %s1205
          %s1207 = sshll.u32 %s1185, 4
          %s1208 = int_to_ptr.vmem [resolvable:$true] %s1207
          %1213 = dma.vmem_to_hbm [thread:$0]  %s1208, 1024, %s1206, %s1182, 256, 256, 16
        $region68: #{normal_head_forward.1} parent=63 // pred_fallthru
          _
        // Predicated region
        $region69: #{normal_head_forward.1} parent=63 // pred_check
          %p1214 = pneg %p331
        $region70: #{normal_head_forward.1} parent=63 // pred_check_branch
          %1216 = sbr.rel (%p1214) target = $region72
        $region71: #{normal_head_forward.1} parent=63 // pred_region
          %s1217 = smul.u32 2, %s38
          %s1219 = ssub.s32 512, 512
          %1220 = vsyncadd %s1187, %s1219
          %s1221 = smul.addr %s37, 4
          %s1222 = sadd.s32 %s1217, %s1221
          %s1223 = smul.addr %s1222, 128
          %s1224 = scalar_lea.hbm %s12, %s1223
          %s1225 = sshll.u32 %s1190, 4
          %s1226 = int_to_ptr.vmem [resolvable:$true] %s1225
          %1231 = dma.vmem_to_hbm [thread:$0]  %s1226, 512, %s1224, %s1187, 256, 256, 16
        $region72: #{normal_head_forward.1} parent=63 // pred_fallthru
          _
        // Predicated region
        $region73: #{normal_head_forward.1} parent=63 // pred_check
          %p1232 = pneg %p359
        $region74: #{normal_head_forward.1} parent=63 // pred_check_branch
          %1234 = sbr.rel (%p1232) target = $region76
        $region75: #{normal_head_forward.1} parent=63 // pred_region
          %s1235 = smul.u32 2, %s38
          %s1237 = ssub.s32 32, 32
          %1238 = vsyncadd %s1192, %s1237
          %s1239 = smul.addr %s37, 2
          %s1240 = sadd.s32 %s1235, %s1239
          %s1241 = smul.addr %s1240, 16
          %s1242 = scalar_lea.hbm %s13, %s1241
          %s1244 = sshll.u32 %s1195, 4
          %s1245 = int_to_ptr.vmem [resolvable:$true] %s1244
          %1247 = dma.vmem_to_hbm [thread:$0]  %s1245, 32, %s1242, %s1192
        $region76: #{normal_head_forward.1} parent=63 // pred_fallthru
          _
      $region64: #{normal_head_forward.1} parent=5 // pred_fallthru
        _
      %p1248 = scmp.le.s32.totalorder 2, %s28
      // Predicated region
      $region77: #{normal_head_forward.1} parent=5 // pred_check
        %p1249 = pneg %p1248
      $region78: #{normal_head_forward.1} parent=5 // pred_check_branch
        %1251 = sbr.rel (%p1249) target = $region80
      $region79: #{normal_head_forward.1} parent=5 // pred_region
        %s1252 = ssub.s32 %s28, 2
        // Predicated region
        $region81: #{normal_head_forward.1} parent=79 // pred_check
          %p1253 = pneg %p309
        $region82: #{normal_head_forward.1} parent=79 // pred_check_branch
          %1255 = sbr.rel (%p1253) target = $region84
        $region83: #{normal_head_forward.1} parent=79 // pred_region
          %s1256 = sand.u32 %s294, 1
          %s1257 = scalar_lea.sflag [#allocation4], %s1256
          %s1258 = sand.u32 %s294, 1
          %s1259 = smul.addr %s1258, 64
          %s1260 = scalar_lea.vmem [#allocation3], %s1259
          %1261 = dma.done %s1257, 1024
        $region84: #{normal_head_forward.1} parent=79 // pred_fallthru
          _
        // Predicated region
        $region85: #{normal_head_forward.1} parent=79 // pred_check
          %p1262 = pneg %p337
        $region86: #{normal_head_forward.1} parent=79 // pred_check_branch
          %1264 = sbr.rel (%p1262) target = $region88
        $region87: #{normal_head_forward.1} parent=79 // pred_region
          %s1265 = sand.u32 %s34, 1
          %s1266 = scalar_lea.sflag [#allocation6], %s1265
          %s1267 = sand.u32 %s322, 1
          %s1268 = smul.addr %s1267, 32
          %s1269 = scalar_lea.vmem [#allocation5], %s1268
          %1270 = dma.done %s1266, 512
        $region88: #{normal_head_forward.1} parent=79 // pred_fallthru
          _
        // Predicated region
        $region89: #{normal_head_forward.1} parent=79 // pred_check
          %p1271 = pneg %p365
        $region90: #{normal_head_forward.1} parent=79 // pred_check_branch
          %1273 = sbr.rel (%p1271) target = $region92
        $region91: #{normal_head_forward.1} parent=79 // pred_region
          %s1274 = sand.u32 %s34, 1
          %s1275 = scalar_lea.sflag [#allocation6], %s1274
          %s1276 = sand.u32 %s350, 1
          %s1277 = smul.addr %s1276, 2
          %s1278 = scalar_lea.vmem [#allocation7], %s1277
          %1279 = dma.done %s1275, 32
        $region92: #{normal_head_forward.1} parent=79 // pred_fallthru
          _
      $region80: #{normal_head_forward.1} parent=5 // pred_fallthru
        _
    $region6: #{normal_head_forward.1} parent=1 // loop_footer
      %s32 = sadd.s32 1, %s28
    $region7: #{normal_head_forward.1} parent=1 // loop_footer_branch
      %27 = sbr.rel target = $region3
    $region8: #{normal_head_forward.1} parent=1 // loop_exit
      _
    %1280 = vsyncpa [#allocation4], 1
    %s1281 = scalar_lea.sflag [#allocation4], 1
    %1282 = vsyncpa %s1281, 1
    %1283 = vsyncpa [#allocation6], 1
    %s1284 = scalar_lea.sflag [#allocation6], 1
    %1285 = vsyncpa %s1284, 1

</llo_original>
